<compile_context>
chip_gen: v7x
topology: tpu7x:2x2x1
jax: 0.10.0
libtpu: 0.0.40
codegen_flags: <defaults>
</compile_context>

<pallas_src>
import functools

import jax
import jax.numpy as jnp
from jax.experimental import pallas as pl
from jax.experimental.pallas import tpu as pltpu

K_HOPS = 1  # SGConv K (module default)


# --------------------------------------------------------------------------------------
# One-time graph precompute: edge lists -> dense adjacency (+ degrees), scatter-free
# (iota one-hots + MXU matmul).  Runs once per (edge_index, edge_weights), not per forward.
# --------------------------------------------------------------------------------------
def _adjacency_kernel(row_ref, col_ref, w_ref, adj_ref, deg_ref):
    f32 = jnp.float32
    n_nodes = adj_ref.shape[0]
    n_edges = row_ref.shape[0]

    # oh_col_ne[n, e] = (col[e] == n),  oh_row_en[e, n] = (row[e] == n)
    iota_ne = jax.lax.broadcasted_iota(jnp.int32, (n_nodes, n_edges), 0)
    iota_en = jax.lax.broadcasted_iota(jnp.int32, (n_edges, n_nodes), 1)
    oh_col_ne = (col_ref[...] == iota_ne).astype(f32)              # [N, E]
    oh_row_en = (row_ref[...] == iota_en).astype(f32)              # [E, N]

    # adj[c, r] = sum of edge weights with (col=c, row=r); self loops = identity (w=1).
    # One-time precompute -> explicit HIGHEST precision (exactness over speed here).
    adj = jnp.dot(oh_col_ne, w_ref[...] * oh_row_en,
                  preferred_element_type=f32,
                  precision=jax.lax.Precision.HIGHEST)              # [N, N]
    eye = (jax.lax.broadcasted_iota(jnp.int32, (n_nodes, n_nodes), 0)
           == jax.lax.broadcasted_iota(jnp.int32, (n_nodes, n_nodes), 1)).astype(f32)
    adj_ref[...] = adj + eye

    # deg as a matvec on the already-resident one-hot (MXU) rather than an XLU row-sum.
    deg_ref[...] = jnp.dot(oh_col_ne, w_ref[...],
                           preferred_element_type=f32,
                           precision=jax.lax.Precision.HIGHEST) + 1.0   # [N, 1]


def _build_normalized_adjacency(edge_index, edge_weights, n_nodes):
    """Scatter-free gcn_norm (add_self_loops=True).  Returns bf16 A_hat [N, N]."""
    n_edges = edge_index.shape[1]
    row_e1 = edge_index[0].astype(jnp.int32).reshape(n_edges, 1)
    col_1e = edge_index[1].astype(jnp.int32).reshape(1, n_edges)
    w_e1 = edge_weights.astype(jnp.float32).reshape(n_edges, 1)

    adj, deg = pl.pallas_call(
        _adjacency_kernel,
        out_shape=(jax.ShapeDtypeStruct((n_nodes, n_nodes), jnp.float32),
                   jax.ShapeDtypeStruct((n_nodes, 1), jnp.float32)),
        grid=(1,),
        in_specs=[
            pl.BlockSpec((n_edges, 1), lambda i: (0, 0)),   # row indices
            pl.BlockSpec((1, n_edges), lambda i: (0, 0)),   # col indices
            pl.BlockSpec((n_edges, 1), lambda i: (0, 0)),   # edge weights
        ],
        out_specs=(pl.BlockSpec((n_nodes, n_nodes), lambda i: (0, 0)),
                   pl.BlockSpec((n_nodes, 1), lambda i: (0, 0))),
        compiler_params=pltpu.CompilerParams(
            dimension_semantics=("arbitrary",),
            vmem_limit_bytes=16 * 1024 * 1024,
        ),
    )(row_e1, col_1e, w_e1)

    # A_hat = D^-1/2 (Adj + I) D^-1/2 in exact f32, cast once to bf16 for the hot kernel.
    dis = jnp.where(deg > 0.0, jax.lax.rsqrt(deg), 0.0)             # [N, 1]
    return (dis * adj * dis.T).astype(jnp.bfloat16)


# --------------------------------------------------------------------------------------
# Per-forward kernel: L2 normalize -> A_hat propagation (row-blocked) -> per-trial linear.
# Layout: trials packed into the lane dim, x -> [N, B*T], out -> [N, B*H] (lane-dense).
# --------------------------------------------------------------------------------------
def _sgc_forward_kernel(a_ref, x_ref, gsum_ref, wbd_ref, b_ref, o_ref, *, k_hops):
    f32, bf16 = jnp.float32, jnp.bfloat16

    # ---- F.normalize(x, p=2, dim=-1) per (node, trial): one bf16 MXU pass against the
    #      block-diagonal ones matrix kron(I_B, 1_{TxT}) gives the group sum-of-squares
    #      already broadcast over each trial's T lanes. ----
    x = x_ref[...]                                                  # [N, B*T] f32
    sq = jnp.dot((x * x).astype(bf16), gsum_ref[...],
                 preferred_element_type=f32)                        # [N, B*T]
    inv = jax.lax.rsqrt(jnp.maximum(sq, 1e-24))                     # == 1 / max(||x||, 1e-12)
    xn = x * inv                                                    # f32 (VPU)

    # ---- K-hop propagation with the A_hat row block owned by this grid step ----
    a = a_ref[...]                                                  # [tm, N] bf16
    if k_hops == 1:
        h = jnp.dot(a, xn.astype(bf16), preferred_element_type=f32)     # [tm, B*T]
    else:
        # K > 1 needs the full A_hat every hop; the wrapper forces tm == N in that case.
        h = xn
        for _ in range(k_hops):
            h = jnp.dot(a, h.astype(bf16), preferred_element_type=f32)

    # ---- per-trial Linear(T -> H) through the block-diagonal bf16 weight ----
    out = jnp.dot(h.astype(bf16), wbd_ref[...],
                  preferred_element_type=f32) + b_ref[...]
    o_ref[...] = out.astype(o_ref.dtype)                            # [tm, B*H] lane-dense


def _pick_row_block(n_nodes, k_hops):
    """Node-row block size: >=2 blocks when possible (v7x megacore), rows multiple of 8."""
    if k_hops != 1:
        return n_nodes          # K > 1 needs the full square A_hat inside the kernel
    for tm in (256, 128, 64, 32, 16, 8):
        if tm < n_nodes and n_nodes % tm == 0:
            return tm
    return n_nodes


def simple_gcn_forward(x, edge_index, edge_weights, lin_w, lin_b, *, k_hops=K_HOPS):
    """x: [B, N, T] (or [N, T]); edge_index: [2, E] int; edge_weights: [E];
    lin_w: [H, T] (torch Linear layout); lin_b: [H].  Returns [B, N, H] (or [N, H])."""
    squeeze = x.ndim == 2
    if squeeze:
        x = x[None]
    n_trials, n_nodes, t_steps = x.shape
    num_hiddens = lin_b.shape[0]
    bt, bh = n_trials * t_steps, n_trials * num_hiddens

    # ---- static precompute: depends only on graph/module weights (hoisted out of the
    #      per-forward hot path).  For repeated inference with fixed weights/graph these
    #      should be computed once and reused; under jit they are traced once. ----
    a_hat16 = _build_normalized_adjacency(edge_index, edge_weights, n_nodes)  # bf16 [N, N]
    gsum16 = jnp.kron(jnp.eye(n_trials, dtype=jnp.bfloat16),
                      jnp.ones((t_steps, t_steps), jnp.bfloat16))             # [B*T, B*T]
    # Block-diagonal per-trial linear weight built directly in bf16 (no f32 intermediate).
    # B^2*T*H elements: fine for small B; for large B use a trial grid axis instead.
    wbd16 = jnp.kron(jnp.eye(n_trials, dtype=jnp.bfloat16),
                     lin_w.T.astype(jnp.bfloat16))                            # [B*T, B*H]
    b_packed = jnp.tile(lin_b.astype(jnp.float32), n_trials).reshape(1, bh)

    # ---- layout plumbing: pack trials into the lane dim (lane-dense in/out slabs) ----
    x_packed = jnp.transpose(x, (1, 0, 2)).reshape(n_nodes, bt).astype(jnp.float32)

    tm = _pick_row_block(n_nodes, k_hops)
    grid = (n_nodes // tm,)

    # VMEM budget from the actual (double-buffered) blocks + f32 intermediates,
    # clamped to [16 MiB scoped floor, 64 MiB v7x physical].
    block_bytes = 2 * (tm * n_nodes * 2        # A_hat row block (bf16)
                       + n_nodes * bt * 4      # packed features (f32, resident)
                       + bt * bt * 2           # group-sum ones matrix (bf16)
                       + bt * bh * 2           # block-diag linear weight (bf16)
                       + bh * 4                # packed bias (f32)
                       + tm * bh * 4)          # output block (f32)
    interm_bytes = 6 * n_nodes * bt * 4 + 4 * tm * bh * 4
    vmem_limit = max(16 * 1024 * 1024,
                     min(64 * 1024 * 1024, 2 * (block_bytes + interm_bytes)))

    kernel = functools.partial(_sgc_forward_kernel, k_hops=k_hops)
    out_packed = pl.pallas_call(
        kernel,
        out_shape=jax.ShapeDtypeStruct((n_nodes, bh), jnp.float32),
        grid=grid,
        in_specs=[
            pl.BlockSpec((tm, n_nodes), lambda i: (i, 0)),   # A_hat row block
            pl.BlockSpec((n_nodes, bt), lambda i: (0, 0)),   # packed features (resident)
            pl.BlockSpec((bt, bt), lambda i: (0, 0)),        # group-sum ones matrix
            pl.BlockSpec((bt, bh), lambda i: (0, 0)),        # block-diag linear weight
            pl.BlockSpec((1, bh), lambda i: (0, 0)),         # packed bias
        ],
        out_specs=pl.BlockSpec((tm, bh), lambda i: (i, 0)),
        compiler_params=pltpu.CompilerParams(
            dimension_semantics=("parallel",),
            vmem_limit_bytes=vmem_limit,
        ),
    )(a_hat16, x_packed, gsum16, wbd16, b_packed)

    out = out_packed.reshape(n_nodes, n_trials, num_hiddens).transpose(1, 0, 2)
    return out[0] if squeeze else out


def _reference_forward(x, edge_index, edge_weights, lin_w, lin_b, k_hops=K_HOPS):
    """Pure-JAX f32 reference matching the PyTorch module (correctness check only)."""
    _, n_nodes, _ = x.shape
    xn = x / jnp.maximum(jnp.linalg.norm(x, axis=-1, keepdims=True), 1e-12)
    self_idx = jnp.arange(n_nodes, dtype=edge_index.dtype)
    row = jnp.concatenate([edge_index[0], self_idx])
    col = jnp.concatenate([edge_index[1], self_idx])
    w = jnp.concatenate([edge_weights.astype(jnp.float32), jnp.ones((n_nodes,), jnp.float32)])
    deg = jnp.zeros((n_nodes,), jnp.float32).at[col].add(w)
    dis = jnp.where(deg > 0, 1.0 / jnp.sqrt(deg), 0.0)
    norm = dis[row] * w * dis[col]
    a_hat = jnp.zeros((n_nodes, n_nodes), jnp.float32).at[col, row].add(norm)
    h = xn
    for _ in range(k_hops):
        h = jnp.einsum("nm,bmt->bnt", a_hat, h)
    return h @ lin_w.T + lin_b


if __name__ == "__main__":
    # B EEG trials sharing one graph of N channel-nodes, T time-step features, H hiddens.
    B, N, T, H = 8, 32, 16, 32

    key = jax.random.PRNGKey(0)
    k_x, k_ew, k_w, k_b = jax.random.split(key, 4)

    x = jax.random.normal(k_x, (B, N, T), dtype=jnp.float32)

    # Deterministic bidirectional ring graph, no self loops: E = 2N edges.
    src = jnp.arange(N, dtype=jnp.int32)
    dst = (src + 1) % N
    edge_index = jnp.stack([jnp.concatenate([src, dst]),
                            jnp.concatenate([dst, src])], axis=0)   # [2, 2N]
    E = edge_index.shape[1]

    edge_weights = jax.random.uniform(k_ew, (E,), jnp.float32, 0.5, 1.5)
    lin_w = jax.random.normal(k_w, (H, T), dtype=jnp.float32) * (1.0 / jnp.sqrt(T))
    lin_b = jax.random.normal(k_b, (H,), dtype=jnp.float32) * 0.01

    fwd = jax.jit(simple_gcn_forward)
    out = fwd(x, edge_index, edge_weights, lin_w, lin_b)
    jax.block_until_ready(out)
    assert out.shape == (B, N, H) and out.dtype == jnp.float32

    ref = _reference_forward(x, edge_index, edge_weights, lin_w, lin_b)
    max_err = float(jnp.max(jnp.abs(out - ref)))
    assert max_err < 5e-2, f"max abs err vs reference: {max_err}"

    print("KERNEL_OK")
</pallas_src>

<mosaic_0001>
module attributes {stable_mosaic.version = 11 : i64} {
  func.func @_adjacency_kernel(%arg0: i32, %arg1: memref<64x1xi32, #tpu.memory_space<vmem>>, %arg2: memref<1x64xi32, #tpu.memory_space<vmem>>, %arg3: memref<64x1xf32, #tpu.memory_space<vmem>>, %arg4: memref<32x32xf32, #tpu.memory_space<vmem>>, %arg5: memref<32x1xf32, #tpu.memory_space<vmem>>) attributes {dimension_semantics = [#tpu.dimension_semantics<arbitrary>], iteration_bounds = array<i64: 1>, scalar_prefetch = 0 : i64, scratch_operands = 0 : i64, tpu.core_type = #tpu.core_type<tc>, window_params = [{pipeline_mode = #tpu.pipeline_mode<synchronous>, transform_indices = @transform_0, window_bounds = array<i64: 64, 1>}, {pipeline_mode = #tpu.pipeline_mode<synchronous>, transform_indices = @transform_1, window_bounds = array<i64: 1, 64>}, {pipeline_mode = #tpu.pipeline_mode<synchronous>, transform_indices = @transform_2, window_bounds = array<i64: 64, 1>}, {pipeline_mode = #tpu.pipeline_mode<synchronous>, transform_indices = @transform_3, window_bounds = array<i64: 32, 32>}, {pipeline_mode = #tpu.pipeline_mode<synchronous>, transform_indices = @transform_4, window_bounds = array<i64: 32, 1>}]} {
    %0 = tpu.iota {dimensions = array<i32: 0>} : vector<32x64xi32>
    %1 = tpu.iota {dimensions = array<i32: 1>} : vector<64x32xi32>
    %c0 = arith.constant 0 : index
    %c0_0 = arith.constant 0 : index
    %2 = vector.load %arg2[%c0, %c0_0] : memref<1x64xi32, #tpu.memory_space<vmem>>, vector<1x64xi32>
    %3 = vector.broadcast %2 : vector<1x64xi32> to vector<32x64xi32>
    %4 = arith.cmpi eq, %3, %0 : vector<32x64xi32>
    %5 = arith.extui %4 : vector<32x64xi1> to vector<32x64xi32>
    %6 = arith.sitofp %5 : vector<32x64xi32> to vector<32x64xf32>
    %c0_1 = arith.constant 0 : index
    %c0_2 = arith.constant 0 : index
    %7 = vector.load %arg1[%c0_1, %c0_2] : memref<64x1xi32, #tpu.memory_space<vmem>>, vector<64x1xi32>
    %8 = vector.broadcast %7 : vector<64x1xi32> to vector<64x32xi32>
    %9 = arith.cmpi eq, %8, %1 : vector<64x32xi32>
    %10 = arith.extui %9 : vector<64x32xi1> to vector<64x32xi32>
    %11 = arith.sitofp %10 : vector<64x32xi32> to vector<64x32xf32>
    %c0_3 = arith.constant 0 : index
    %c0_4 = arith.constant 0 : index
    %12 = vector.load %arg3[%c0_3, %c0_4] : memref<64x1xf32, #tpu.memory_space<vmem>>, vector<64x1xf32>
    %13 = vector.broadcast %12 : vector<64x1xf32> to vector<64x32xf32>
    %14 = arith.mulf %13, %11 : vector<64x32xf32>
    %cst = arith.constant dense<0.000000e+00> : vector<32x32xf32>
    %15 = tpu.matmul %6, %14, %cst {dimension_numbers = #tpu.dot_dimension_numbers<[1], [0], [0], [1], [0, 0, 1, 1], [], []>, precision = #tpu.contract_precision<fp32>} : vector<32x64xf32>, vector<64x32xf32>, vector<32x32xf32> -> vector<32x32xf32>
    %16 = tpu.iota {dimensions = array<i32: 0>} : vector<32x32xi32>
    %17 = tpu.iota {dimensions = array<i32: 1>} : vector<32x32xi32>
    %18 = arith.cmpi eq, %16, %17 : vector<32x32xi32>
    %19 = arith.extui %18 : vector<32x32xi1> to vector<32x32xi32>
    %20 = arith.sitofp %19 : vector<32x32xi32> to vector<32x32xf32>
    %21 = arith.addf %15, %20 : vector<32x32xf32>
    %c0_5 = arith.constant 0 : index
    %c0_6 = arith.constant 0 : index
    %22 = vector.load %arg4[%c0_5, %c0_6] : memref<32x32xf32, #tpu.memory_space<vmem>>, vector<32x32xf32>
    tpu.vector_store %arg4[%c0_5, %c0_6], %21 {strides = array<i32>} : memref<32x32xf32, #tpu.memory_space<vmem>>, vector<32x32xf32>,
    %c0_7 = arith.constant 0 : index
    %c0_8 = arith.constant 0 : index
    %23 = vector.load %arg3[%c0_7, %c0_8] : memref<64x1xf32, #tpu.memory_space<vmem>>, vector<64x1xf32>
    %cst_9 = arith.constant dense<0.000000e+00> : vector<32x1xf32>
    %24 = tpu.matmul %6, %23, %cst_9 {dimension_numbers = #tpu.dot_dimension_numbers<[1], [0], [0], [1], [0, 0, 1, 1], [], []>, precision = #tpu.contract_precision<fp32>} : vector<32x64xf32>, vector<64x1xf32>, vector<32x1xf32> -> vector<32x1xf32>
    %cst_10 = arith.constant 1.000000e+00 : f32
    %25 = vector.broadcast %cst_10 : f32 to vector<32x1xf32>
    %26 = arith.addf %24, %25 : vector<32x1xf32>
    %c0_11 = arith.constant 0 : index
    %c0_12 = arith.constant 0 : index
    %27 = vector.load %arg5[%c0_11, %c0_12] : memref<32x1xf32, #tpu.memory_space<vmem>>, vector<32x1xf32>
    tpu.vector_store %arg5[%c0_11, %c0_12], %26 {strides = array<i32>} : memref<32x1xf32, #tpu.memory_space<vmem>>, vector<32x1xf32>,
    return
  }
  func.func @transform_0(%arg0: i32) -> (i32, i32) {
    %c0_i32 = arith.constant 0 : i32
    %c0_i32_0 = arith.constant 0 : i32
    %c0_i32_1 = arith.constant 0 : i32
    return %c0_i32, %c0_i32_0 : i32, i32
  }
  func.func @transform_1(%arg0: i32) -> (i32, i32) {
    %c0_i32 = arith.constant 0 : i32
    %c0_i32_0 = arith.constant 0 : i32
    %c0_i32_1 = arith.constant 0 : i32
    return %c0_i32, %c0_i32_0 : i32, i32
  }
  func.func @transform_2(%arg0: i32) -> (i32, i32) {
    %c0_i32 = arith.constant 0 : i32
    %c0_i32_0 = arith.constant 0 : i32
    %c0_i32_1 = arith.constant 0 : i32
    return %c0_i32, %c0_i32_0 : i32, i32
  }
  func.func @transform_3(%arg0: i32) -> (i32, i32) {
    %c0_i32 = arith.constant 0 : i32
    %c0_i32_0 = arith.constant 0 : i32
    %c0_i32_1 = arith.constant 0 : i32
    return %c0_i32, %c0_i32_0 : i32, i32
  }
  func.func @transform_4(%arg0: i32) -> (i32, i32) {
    %c0_i32 = arith.constant 0 : i32
    %c0_i32_0 = arith.constant 0 : i32
    %c0_i32_1 = arith.constant 0 : i32
    return %c0_i32, %c0_i32_0 : i32, i32
  }
}

module attributes {stable_mosaic.version = 11 : i64} {
  func.func @_sgc_forward_kernel(%arg0: i32, %arg1: memref<16x32xbf16, #tpu.memory_space<vmem>>, %arg2: memref<32x128xf32, #tpu.memory_space<vmem>>, %arg3: memref<128x128xbf16, #tpu.memory_space<vmem>>, %arg4: memref<128x256xbf16, #tpu.memory_space<vmem>>, %arg5: memref<1x256xf32, #tpu.memory_space<vmem>>, %arg6: memref<16x256xf32, #tpu.memory_space<vmem>>) attributes {dimension_semantics = [#tpu.dimension_semantics<parallel>], iteration_bounds = array<i64: 2>, scalar_prefetch = 0 : i64, scratch_operands = 0 : i64, tpu.core_type = #tpu.core_type<tc>, window_params = [{transform_indices = @transform_0, window_bounds = array<i64: 16, 32>}, {pipeline_mode = #tpu.pipeline_mode<synchronous>, transform_indices = @transform_1, window_bounds = array<i64: 32, 128>}, {pipeline_mode = #tpu.pipeline_mode<synchronous>, transform_indices = @transform_2, window_bounds = array<i64: 128, 128>}, {pipeline_mode = #tpu.pipeline_mode<synchronous>, transform_indices = @transform_3, window_bounds = array<i64: 128, 256>}, {pipeline_mode = #tpu.pipeline_mode<synchronous>, transform_indices = @transform_4, window_bounds = array<i64: 1, 256>}, {transform_indices = @transform_5, window_bounds = array<i64: 16, 256>}]} {
    %c0 = arith.constant 0 : index
    %c0_0 = arith.constant 0 : index
    %0 = vector.load %arg2[%c0, %c0_0] : memref<32x128xf32, #tpu.memory_space<vmem>>, vector<32x128xf32>
    %1 = arith.mulf %0, %0 : vector<32x128xf32>
    %2 = arith.truncf %1 : vector<32x128xf32> to vector<32x128xbf16>
    %c0_1 = arith.constant 0 : index
    %c0_2 = arith.constant 0 : index
    %3 = vector.load %arg3[%c0_1, %c0_2] : memref<128x128xbf16, #tpu.memory_space<vmem>>, vector<128x128xbf16>
    %cst = arith.constant dense<0.000000e+00> : vector<32x128xf32>
    %4 = tpu.matmul %2, %3, %cst {dimension_numbers = #tpu.dot_dimension_numbers<[1], [0], [0], [1], [0, 0, 1, 1], [], []>} : vector<32x128xbf16>, vector<128x128xbf16>, vector<32x128xf32> -> vector<32x128xf32>
    %cst_3 = arith.constant 1.000000e-24 : f32
    %5 = vector.broadcast %cst_3 : f32 to vector<32x128xf32>
    %6 = arith.maximumf %4, %5 : vector<32x128xf32>
    %7 = math.rsqrt %6 : vector<32x128xf32>
    %8 = arith.mulf %0, %7 : vector<32x128xf32>
    %c0_4 = arith.constant 0 : index
    %c0_5 = arith.constant 0 : index
    %9 = vector.load %arg1[%c0_4, %c0_5] : memref<16x32xbf16, #tpu.memory_space<vmem>>, vector<16x32xbf16>
    %10 = arith.truncf %8 : vector<32x128xf32> to vector<32x128xbf16>
    %cst_6 = arith.constant dense<0.000000e+00> : vector<16x128xf32>
    %11 = tpu.matmul %9, %10, %cst_6 {dimension_numbers = #tpu.dot_dimension_numbers<[1], [0], [0], [1], [0, 0, 1, 1], [], []>} : vector<16x32xbf16>, vector<32x128xbf16>, vector<16x128xf32> -> vector<16x128xf32>
    %12 = arith.truncf %11 : vector<16x128xf32> to vector<16x128xbf16>
    %c0_7 = arith.constant 0 : index
    %c0_8 = arith.constant 0 : index
    %13 = vector.load %arg4[%c0_7, %c0_8] : memref<128x256xbf16, #tpu.memory_space<vmem>>, vector<128x256xbf16>
    %cst_9 = arith.constant dense<0.000000e+00> : vector<16x256xf32>
    %14 = tpu.matmul %12, %13, %cst_9 {dimension_numbers = #tpu.dot_dimension_numbers<[1], [0], [0], [1], [0, 0, 1, 1], [], []>} : vector<16x128xbf16>, vector<128x256xbf16>, vector<16x256xf32> -> vector<16x256xf32>
    %c0_10 = arith.constant 0 : index
    %c0_11 = arith.constant 0 : index
    %15 = vector.load %arg5[%c0_10, %c0_11] : memref<1x256xf32, #tpu.memory_space<vmem>>, vector<1x256xf32>
    %16 = vector.broadcast %15 : vector<1x256xf32> to vector<16x256xf32>
    %17 = arith.addf %14, %16 : vector<16x256xf32>
    %c0_12 = arith.constant 0 : index
    %c0_13 = arith.constant 0 : index
    %18 = vector.load %arg6[%c0_12, %c0_13] : memref<16x256xf32, #tpu.memory_space<vmem>>, vector<16x256xf32>
    tpu.vector_store %arg6[%c0_12, %c0_13], %17 {strides = array<i32>} : memref<16x256xf32, #tpu.memory_space<vmem>>, vector<16x256xf32>,
    return
  }
  func.func @transform_0(%arg0: i32) -> (i32, i32) {
    %c0_i32 = arith.constant 0 : i32
    %c0_i32_0 = arith.constant 0 : i32
    return %arg0, %c0_i32 : i32, i32
  }
  func.func @transform_1(%arg0: i32) -> (i32, i32) {
    %c0_i32 = arith.constant 0 : i32
    %c0_i32_0 = arith.constant 0 : i32
    %c0_i32_1 = arith.constant 0 : i32
    return %c0_i32, %c0_i32_0 : i32, i32
  }
  func.func @transform_2(%arg0: i32) -> (i32, i32) {
    %c0_i32 = arith.constant 0 : i32
    %c0_i32_0 = arith.constant 0 : i32
    %c0_i32_1 = arith.constant 0 : i32
    return %c0_i32, %c0_i32_0 : i32, i32
  }
  func.func @transform_3(%arg0: i32) -> (i32, i32) {
    %c0_i32 = arith.constant 0 : i32
    %c0_i32_0 = arith.constant 0 : i32
    %c0_i32_1 = arith.constant 0 : i32
    return %c0_i32, %c0_i32_0 : i32, i32
  }
  func.func @transform_4(%arg0: i32) -> (i32, i32) {
    %c0_i32 = arith.constant 0 : i32
    %c0_i32_0 = arith.constant 0 : i32
    %c0_i32_1 = arith.constant 0 : i32
    return %c0_i32, %c0_i32_0 : i32, i32
  }
  func.func @transform_5(%arg0: i32) -> (i32, i32) {
    %c0_i32 = arith.constant 0 : i32
    %c0_i32_0 = arith.constant 0 : i32
    return %arg0, %c0_i32 : i32, i32
  }
}

</mosaic_0001>

<llo_original>
// kernel: tile.8
$region0: #{tile.8}
  #allocation0 [shape = 's32[1]{0}', space=sflag, size = 0x4, scoped, tag = 'scoped memory for tile.8']
  %s0 = inlined_call_operand.vmem [shape: f32[32], index: 0, kind: input, shape index: {}]
  %s1 = inlined_call_operand.vmem [shape: f32[8,32], index: 1, kind: output, shape index: {}]
  // Predicated region
  $region2: #{tile.8} parent=0 // pred_check
    _
  $region3: #{tile.8} parent=0 // pred_check_branch
    %3 = sbr.rel (0) target = $region5
  $region4: #{tile.8} parent=0 // pred_region
    _
  $region5: #{tile.8} parent=0 // pred_fallthru
    _
  %v4 = vld [vmem:[%s0] ss:$0 sm:$0xff]
  %5 = vst [vmem:[%s1] sm:$0xff] %v4

// kernel: tile.9
$region0: #{tile.9}
  %s0 = inlined_call_operand.vmem [shape: f32[8,32], index: 0, kind: input, shape index: {}]
  %s1 = inlined_call_operand.vmem [shape: f32[1,256], index: 1, kind: output, shape index: {}]
  $region1: #{tile.9} parent=0
    #allocation0 [shape = 'u8[8192]{0}', space=vmem, size = 0x2000, scoped, tag = 'scoped mem for output reshape']
    %s2 = smov 3
    %v3 = vld [vmem:[%s0] ss:$4 sm:%s2]
    %vm4 = vcmask 261120
    %5 = vst.msk [vmem:[#allocation0] ss:$8 sm:$0x3] %vm4, %v3
    %s6 = scalar_lea.vmem %s0, 3
    %s7 = smov 3
    %v8 = vld [vmem:[%s6] ss:$4 sm:%s7]
    %9 = vrot.lane.b32.xlu0 %v8, 96
    %v10 = vpop.permute.xlu0 %9
    %vm11 = vcmask 1048320
    %12 = vst.msk [vmem:[#allocation0] ss:$8 sm:$0x3] %vm11, %v10
    %s13 = scalar_lea.vmem %s0, 2
    %s14 = smov 3
    %v15 = vld [vmem:[%s13] ss:$4 sm:%s14]
    %16 = vrot.lane.b32.xlu0 %v15, 64
    %v17 = vpop.permute.xlu0 %16
    %vm18 = vcmask 785920
    %19 = vst.msk [vmem:[#allocation0] ss:$8 sm:$0x3] %vm18, %v17
    %s20 = scalar_lea.vmem %s0, 1
    %s21 = smov 3
    %v22 = vld [vmem:[%s20] ss:$4 sm:%s21]
    %23 = vrot.lane.b32.xlu0 %v22, 32
    %v24 = vpop.permute.xlu0 %23
    %vm25 = vcmask 523520
    %26 = vst.msk [vmem:[#allocation0] ss:$8 sm:$0x3] %vm25, %v24
    %s28 = sshllo.u32 0, 1
    %v30 = vld [vmem:[#allocation0] sm:%s28]
    %s31 = sshllo.u32 0, 1
    %32 = vst [vmem:[%s1] sm:%s31] %v30
    %s33 = scalar_lea.vmem [#allocation0], 8
    %v34 = vld [vmem:[%s33] sm:%s28]
    %s35 = sshllo.u32 0, 1
    %s36 = scalar_lea.vmem %s1, 1
    %37 = vst [vmem:[%s36] sm:%s35] %v34

// kernel: simple_gcn_forward.2
$region0: #{simple_gcn_forward.2}
  #allocation0 [shape = 'u32[]', space=smem, size = 0x4, offset = 0x4, fixed_abs, tag = 'smem constant byte address 0x4 - core index']
  #allocation1 [shape = 'u32[144,128]{1,0:T(1,128)}', space=vmem, size = 0x12000, scoped, tag = 'internal scratch']
  %s0 = inlined_call_operand.vmem [shape: s32[64,1], index: 0, kind: input, shape index: {}]
  %s1 = inlined_call_operand.vmem [shape: s32[1,64], index: 1, kind: input, shape index: {}]
  %s2 = inlined_call_operand.vmem [shape: f32[64,1], index: 2, kind: input, shape index: {}]
  %s3 = inlined_call_operand.vmem [shape: f32[32,32], index: 3, kind: output, shape index: {0}]
  %s4 = inlined_call_operand.vmem [shape: f32[32,1], index: 4, kind: output, shape index: {1}]
  %5 = xla_tuple %s3, %s4
  %s6 = sld [smem:[#allocation0]]
  $region30: #{simple_gcn_forward.2} parent=0
    _
  %s8 = ssub.s32 1, %s6
  %s9 = scalar_select 0, %s8, %s6
  // Predicated region
  $region2: #{simple_gcn_forward.2} parent=0 // pred_check
    _
  $region3: #{simple_gcn_forward.2} parent=0 // pred_check_branch
    %11 = sbr.rel (0) target = $region5
  $region4: #{simple_gcn_forward.2} parent=0 // pred_region
    _
  $region5: #{simple_gcn_forward.2} parent=0 // pred_fallthru
    _
  // Predicated region
  $region6: #{simple_gcn_forward.2} parent=0 // pred_check
    _
  $region7: #{simple_gcn_forward.2} parent=0 // pred_check_branch
    %13 = sbr.rel (0) target = $region9
  $region8: #{simple_gcn_forward.2} parent=0 // pred_region
    _
  $region9: #{simple_gcn_forward.2} parent=0 // pred_fallthru
    _
  // Predicated region
  $region10: #{simple_gcn_forward.2} parent=0 // pred_check
    _
  $region11: #{simple_gcn_forward.2} parent=0 // pred_check_branch
    %15 = sbr.rel (0) target = $region13
  $region12: #{simple_gcn_forward.2} parent=0 // pred_region
    _
  $region13: #{simple_gcn_forward.2} parent=0 // pred_fallthru
    _
  %v16 = vlaneseq
  %v17 = vshrl.u32 %v16, 7
  %v18 = vadd.s32 %v17, 8
  %v19 = vadd.s32 %v17, 16
  %v20 = vadd.s32 %v17, 24
  %v21 = vlaneseq
  %v22 = vand.u32 %v21, 127
  %v23 = vld [vmem:[%s1] sm:$0x1]
  %v24 = vlaneseq
  %v25 = vshrl.u32 %v24, 7
  %v26 = vsub.s32 0, %v25
  %v27 = vrot.slane %v23, %v26
  %vm28 = vcmp.eq.s32.totalorder %v27, %v17
  %vm29 = vcmp.eq.s32.totalorder %v27, %v18
  %vm30 = vcmp.eq.s32.totalorder %v27, %v19
  %vm31 = vcmp.eq.s32.totalorder %v27, %v20
  %v32 = vsel %vm28, 1, 0
  %v33 = vsel %vm29, 1, 0
  %v34 = vsel %vm30, 1, 0
  %v35 = vsel %vm31, 1, 0
  %v36 = vcvt.s32.f32 %v32
  %v37 = vcvt.s32.f32 %v33
  %v38 = vcvt.s32.f32 %v34
  %v39 = vcvt.s32.f32 %v35
  %v40 = vld [vmem:[%s0] sm:$0xff]
  %v41 = vld [vmem:[%s0 + $0x8] sm:$0xff]
  %v42 = vld [vmem:[%s0 + $0x10] sm:$0xff]
  %v43 = vld [vmem:[%s0 + $0x18] sm:$0xff]
  %v44 = vld [vmem:[%s0 + $0x20] sm:$0xff]
  %v45 = vld [vmem:[%s0 + $0x28] sm:$0xff]
  %v46 = vld [vmem:[%s0 + $0x30] sm:$0xff]
  %v47 = vld [vmem:[%s0 + $0x38] sm:$0xff]
  %48 = vset.pattern.permute.xlu0 0
  %49 = vperm.xlu0 %48, %v40
  %v50 = vpop.permute.xlu0 %49
  %51 = vset.pattern.permute.xlu0 0
  %52 = vperm.xlu0 %51, %v41
  %v53 = vpop.permute.xlu0 %52
  %54 = vset.pattern.permute.xlu0 0
  %55 = vperm.xlu0 %54, %v42
  %v56 = vpop.permute.xlu0 %55
  %57 = vset.pattern.permute.xlu0 0
  %58 = vperm.xlu0 %57, %v43
  %v59 = vpop.permute.xlu0 %58
  %60 = vset.pattern.permute.xlu0 0
  %61 = vperm.xlu0 %60, %v44
  %v62 = vpop.permute.xlu0 %61
  %63 = vset.pattern.permute.xlu0 0
  %64 = vperm.xlu0 %63, %v45
  %v65 = vpop.permute.xlu0 %64
  %66 = vset.pattern.permute.xlu0 0
  %67 = vperm.xlu0 %66, %v46
  %v68 = vpop.permute.xlu0 %67
  %69 = vset.pattern.permute.xlu0 0
  %70 = vperm.xlu0 %69, %v47
  %v71 = vpop.permute.xlu0 %70
  %vm72 = vcmp.eq.s32.totalorder %v50, %v22
  %vm73 = vcmp.eq.s32.totalorder %v53, %v22
  %vm74 = vcmp.eq.s32.totalorder %v56, %v22
  %vm75 = vcmp.eq.s32.totalorder %v59, %v22
  %vm76 = vcmp.eq.s32.totalorder %v62, %v22
  %vm77 = vcmp.eq.s32.totalorder %v65, %v22
  %vm78 = vcmp.eq.s32.totalorder %v68, %v22
  %vm79 = vcmp.eq.s32.totalorder %v71, %v22
  %v80 = vsel %vm72, 1, 0
  %v81 = vsel %vm73, 1, 0
  %v82 = vsel %vm74, 1, 0
  %v83 = vsel %vm75, 1, 0
  %v84 = vsel %vm76, 1, 0
  %v85 = vsel %vm77, 1, 0
  %v86 = vsel %vm78, 1, 0
  %v87 = vsel %vm79, 1, 0
  %v88 = vcvt.s32.f32 %v80
  %v89 = vcvt.s32.f32 %v81
  %v90 = vcvt.s32.f32 %v82
  %v91 = vcvt.s32.f32 %v83
  %v92 = vcvt.s32.f32 %v84
  %v93 = vcvt.s32.f32 %v85
  %v94 = vcvt.s32.f32 %v86
  %v95 = vcvt.s32.f32 %v87
  %v96 = vld [vmem:[%s2] sm:$0xff]
  %v97 = vld [vmem:[%s2 + $0x8] sm:$0xff]
  %v98 = vld [vmem:[%s2 + $0x10] sm:$0xff]
  %v99 = vld [vmem:[%s2 + $0x18] sm:$0xff]
  %v100 = vld [vmem:[%s2 + $0x20] sm:$0xff]
  %v101 = vld [vmem:[%s2 + $0x28] sm:$0xff]
  %v102 = vld [vmem:[%s2 + $0x30] sm:$0xff]
  %v103 = vld [vmem:[%s2 + $0x38] sm:$0xff]
  %105 = vset.pattern.permute.xlu0 0
  %106 = vperm.xlu0 %105, %v96
  %v107 = vpop.permute.xlu0 %106
  %110 = vset.pattern.permute.xlu0 0
  %111 = vperm.xlu0 %110, %v97
  %v112 = vpop.permute.xlu0 %111
  %115 = vset.pattern.permute.xlu0 0
  %116 = vperm.xlu0 %115, %v98
  %v117 = vpop.permute.xlu0 %116
  %120 = vset.pattern.permute.xlu0 0
  %121 = vperm.xlu0 %120, %v99
  %v122 = vpop.permute.xlu0 %121
  %125 = vset.pattern.permute.xlu0 0
  %126 = vperm.xlu0 %125, %v100
  %v127 = vpop.permute.xlu0 %126
  %130 = vset.pattern.permute.xlu0 0
  %131 = vperm.xlu0 %130, %v101
  %v132 = vpop.permute.xlu0 %131
  %135 = vset.pattern.permute.xlu0 0
  %136 = vperm.xlu0 %135, %v102
  %v137 = vpop.permute.xlu0 %136
  %140 = vset.pattern.permute.xlu0 0
  %141 = vperm.xlu0 %140, %v103
  %v142 = vpop.permute.xlu0 %141
  %v144 = vmul.f32 %v107, %v88
  %v145 = vmul.f32 %v112, %v89
  %v146 = vmul.f32 %v117, %v90
  %v147 = vmul.f32 %v122, %v91
  %v148 = vmul.f32 %v127, %v92
  %v149 = vmul.f32 %v132, %v93
  %v150 = vmul.f32 %v137, %v94
  %v151 = vmul.f32 %v142, %v95
  %vm152 = vcmp.eq.s32.totalorder %v17, %v22
  %vm153 = vcmp.eq.s32.totalorder %v18, %v22
  %vm154 = vcmp.eq.s32.totalorder %v19, %v22
  %vm155 = vcmp.eq.s32.totalorder %v20, %v22
  %v156 = vsel %vm152, 1, 0
  %v157 = vsel %vm153, 1, 0
  %v158 = vsel %vm154, 1, 0
  %v159 = vsel %vm155, 1, 0
  %v160 = vcvt.s32.f32 %v156
  %v161 = vcvt.s32.f32 %v157
  %v162 = vcvt.s32.f32 %v158
  %v163 = vcvt.s32.f32 %v159
  %vm164 = vcmask 523264
  %v166 = vsel %vm164, %v36, 0
  %v169 = vsel %vm164, %v37, 0
  %v172 = vsel %vm164, %v38, 0
  %v175 = vsel %vm164, %v39, 0
  %177 = vmatprep.subr.mxu0 0.0
  %v178 = vand.u32 %v144, 4294901760
  %179 = vmatpush1.msra.mxu0 %v178
  %180 = vmatprep.subr.mxu0 0.0
  %v181 = vand.u32 %v145, 4294901760
  %182 = vmatpush1.msra.mxu0 %v181
  %183 = vmatprep.subr.mxu0 0.0
  %v184 = vand.u32 %v146, 4294901760
  %185 = vmatpush1.msra.mxu0 %v184
  %186 = vmatprep.subr.mxu0 0.0
  %v187 = vand.u32 %v147, 4294901760
  %188 = vmatpush1.msra.mxu0 %v187
  %189 = vmatprep.subr.mxu0 0.0
  %v190 = vand.u32 %v148, 4294901760
  %191 = vmatpush1.msra.mxu0 %v190
  %192 = vmatprep.subr.mxu0 0.0
  %v193 = vand.u32 %v149, 4294901760
  %194 = vmatpush1.msra.mxu0 %v193
  %195 = vmatprep.subr.mxu0 0.0
  %v196 = vand.u32 %v150, 4294901760
  %197 = vmatpush1.msra.mxu0 %v196
  %198 = vmatprep.subr.mxu0 0.0
  %v199 = vand.u32 %v151, 4294901760
  %200 = vmatpush1.msra.mxu0 %v199
  %201 = vmatprep.subr.mxu0 0.0
  %202 = vmatpush1.msra.mxu0 0.0
  %203 = vmatprep.subr.mxu0 0.0
  %204 = vmatpush1.msra.mxu0 0.0
  %205 = vmatprep.subr.mxu0 0.0
  %206 = vmatpush1.msra.mxu0 0.0
  %207 = vmatprep.subr.mxu0 0.0
  %208 = vmatpush1.msra.mxu0 0.0
  %209 = vmatprep.subr.mxu0 0.0
  %210 = vmatpush1.msra.mxu0 0.0
  %211 = vmatprep.subr.mxu0 0.0
  %212 = vmatpush1.msra.mxu0 0.0
  %213 = vmatprep.subr.mxu0 0.0
  %214 = vmatpush1.msra.mxu0 0.0
  %215 = vmatprep.subr.mxu0 0.0
  %216 = vmatpush1.msra.mxu0 0.0
  %217 = vmatprep.subr.mxu0 0.0
  %218 = vmatpush1.msra.mxu0 0.0
  %219 = vmatprep.subr.mxu0 0.0
  %220 = vmatpush1.msra.mxu0 0.0
  %221 = vmatprep.subr.mxu0 0.0
  %222 = vmatpush1.msra.mxu0 0.0
  %223 = vmatprep.subr.mxu0 0.0
  %224 = vmatpush1.msra.mxu0 0.0
  %225 = vmatprep.subr.mxu0 0.0
  %226 = vmatpush1.msra.mxu0 0.0
  %227 = vmatprep.subr.mxu0 0.0
  %228 = vmatpush1.msra.mxu0 0.0
  %229 = vmatprep.subr.mxu0 0.0
  %230 = vmatpush1.msra.mxu0 0.0
  %231 = vmatprep.subr.mxu0 0.0
  %232 = vmatpush1.msra.mxu0 0.0
  %233 = vmatprep.subr.mxu0 0.0
  %234 = vmatpush1.msra.mxu0 0.0
  %235 = vmatprep.subr.mxu0 0.0
  %236 = vmatpush1.msra.mxu0 0.0
  %237 = vmatprep.subr.mxu0 0.0
  %238 = vmatpush1.msra.mxu0 0.0
  %239 = vmatprep.subr.mxu0 0.0
  %240 = vmatpush1.msra.mxu0 0.0
  %241 = vmatprep.subr.mxu0 0.0
  %242 = vmatpush1.msra.mxu0 0.0
  %243 = vmatprep.subr.mxu0 0.0
  %244 = vmatpush1.msra.mxu0 0.0
  %245 = vmatprep.subr.mxu0 0.0
  %246 = vmatpush1.msra.mxu0 0.0
  %247 = vmatprep.subr.mxu0 0.0
  %248 = vmatpush1.msra.mxu0 0.0
  %249 = vmatprep.mubr.f32.mxu0 0.0
  %v250 = vand.u32 %v166, 4294901760
  %v251 = vsub.f32 %v166, %v250
  %v252 = vand.u32 %v251, 4294901760
  %v253 = vsub.f32 %v251, %v252
  %v254 = vand.u32 %v253, 4294901760
  %255 = vmatmul.mubr.f32.gmra.mrb[0].mxu0 %v254
  %v256 = vpop.f32.mrb[0].mxu0
  %v257 = vadd.f32 %v160, %v256
  %v258 = vpop.f32.mrb[0].mxu0
  %259 = vmatprep.mubr.f32.mxu0 0.0
  %v260 = vand.u32 %v169, 4294901760
  %v261 = vsub.f32 %v169, %v260
  %v262 = vand.u32 %v261, 4294901760
  %v263 = vsub.f32 %v261, %v262
  %v264 = vand.u32 %v263, 4294901760
  %265 = vmatmul.mubr.f32.gmra.mrb[0].mxu0 %v264
  %v266 = vpop.f32.mrb[0].mxu0
  %v267 = vadd.f32 %v161, %v266
  %v268 = vpop.f32.mrb[0].mxu0
  %269 = vmatprep.mubr.f32.mxu0 0.0
  %v270 = vand.u32 %v172, 4294901760
  %v271 = vsub.f32 %v172, %v270
  %v272 = vand.u32 %v271, 4294901760
  %v273 = vsub.f32 %v271, %v272
  %v274 = vand.u32 %v273, 4294901760
  %275 = vmatmul.mubr.f32.gmra.mrb[0].mxu0 %v274
  %v276 = vpop.f32.mrb[0].mxu0
  %v277 = vadd.f32 %v162, %v276
  %v278 = vpop.f32.mrb[0].mxu0
  %279 = vmatprep.mubr.f32.mxu0 0.0
  %v280 = vand.u32 %v175, 4294901760
  %v281 = vsub.f32 %v175, %v280
  %v282 = vand.u32 %v281, 4294901760
  %v283 = vsub.f32 %v281, %v282
  %v284 = vand.u32 %v283, 4294901760
  %285 = vmatmul.mubr.f32.gmra.mrb[0].mxu0 %v284
  %v286 = vpop.f32.mrb[0].mxu0
  %v287 = vadd.f32 %v163, %v286
  %v288 = vpop.f32.mrb[0].mxu0
  %289 = vdwg.mxu0
  %290 = vmatprep.subr.mxu0 0.0
  %v291 = vand.u32 %v144, 4294901760
  %v292 = vsub.f32 %v144, %v291
  %v293 = vand.u32 %v292, 4294901760
  %v294 = vsub.f32 %v292, %v293
  %v295 = vand.u32 %v294, 4294901760
  %296 = vmatpush1.msra.mxu0 %v295
  %297 = vmatprep.subr.mxu0 0.0
  %v298 = vand.u32 %v145, 4294901760
  %v299 = vsub.f32 %v145, %v298
  %v300 = vand.u32 %v299, 4294901760
  %v301 = vsub.f32 %v299, %v300
  %v302 = vand.u32 %v301, 4294901760
  %303 = vmatpush1.msra.mxu0 %v302
  %304 = vmatprep.subr.mxu0 0.0
  %v305 = vand.u32 %v146, 4294901760
  %v306 = vsub.f32 %v146, %v305
  %v307 = vand.u32 %v306, 4294901760
  %v308 = vsub.f32 %v306, %v307
  %v309 = vand.u32 %v308, 4294901760
  %310 = vmatpush1.msra.mxu0 %v309
  %311 = vmatprep.subr.mxu0 0.0
  %v312 = vand.u32 %v147, 4294901760
  %v313 = vsub.f32 %v147, %v312
  %v314 = vand.u32 %v313, 4294901760
  %v315 = vsub.f32 %v313, %v314
  %v316 = vand.u32 %v315, 4294901760
  %317 = vmatpush1.msra.mxu0 %v316
  %318 = vmatprep.subr.mxu0 0.0
  %v319 = vand.u32 %v148, 4294901760
  %v320 = vsub.f32 %v148, %v319
  %v321 = vand.u32 %v320, 4294901760
  %v322 = vsub.f32 %v320, %v321
  %v323 = vand.u32 %v322, 4294901760
  %324 = vmatpush1.msra.mxu0 %v323
  %325 = vmatprep.subr.mxu0 0.0
  %v326 = vand.u32 %v149, 4294901760
  %v327 = vsub.f32 %v149, %v326
  %v328 = vand.u32 %v327, 4294901760
  %v329 = vsub.f32 %v327, %v328
  %v330 = vand.u32 %v329, 4294901760
  %331 = vmatpush1.msra.mxu0 %v330
  %332 = vmatprep.subr.mxu0 0.0
  %v333 = vand.u32 %v150, 4294901760
  %v334 = vsub.f32 %v150, %v333
  %v335 = vand.u32 %v334, 4294901760
  %v336 = vsub.f32 %v334, %v335
  %v337 = vand.u32 %v336, 4294901760
  %338 = vmatpush1.msra.mxu0 %v337
  %339 = vmatprep.subr.mxu0 0.0
  %v340 = vand.u32 %v151, 4294901760
  %v341 = vsub.f32 %v151, %v340
  %v342 = vand.u32 %v341, 4294901760
  %v343 = vsub.f32 %v341, %v342
  %v344 = vand.u32 %v343, 4294901760
  %345 = vmatpush1.msra.mxu0 %v344
  %346 = vmatprep.subr.mxu0 0.0
  %347 = vmatpush1.msra.mxu0 0.0
  %348 = vmatprep.subr.mxu0 0.0
  %349 = vmatpush1.msra.mxu0 0.0
  %350 = vmatprep.subr.mxu0 0.0
  %351 = vmatpush1.msra.mxu0 0.0
  %352 = vmatprep.subr.mxu0 0.0
  %353 = vmatpush1.msra.mxu0 0.0
  %354 = vmatprep.subr.mxu0 0.0
  %355 = vmatpush1.msra.mxu0 0.0
  %356 = vmatprep.subr.mxu0 0.0
  %357 = vmatpush1.msra.mxu0 0.0
  %358 = vmatprep.subr.mxu0 0.0
  %359 = vmatpush1.msra.mxu0 0.0
  %360 = vmatprep.subr.mxu0 0.0
  %361 = vmatpush1.msra.mxu0 0.0
  %362 = vmatprep.subr.mxu0 0.0
  %363 = vmatpush1.msra.mxu0 0.0
  %364 = vmatprep.subr.mxu0 0.0
  %365 = vmatpush1.msra.mxu0 0.0
  %366 = vmatprep.subr.mxu0 0.0
  %367 = vmatpush1.msra.mxu0 0.0
  %368 = vmatprep.subr.mxu0 0.0
  %369 = vmatpush1.msra.mxu0 0.0
  %370 = vmatprep.subr.mxu0 0.0
  %371 = vmatpush1.msra.mxu0 0.0
  %372 = vmatprep.subr.mxu0 0.0
  %373 = vmatpush1.msra.mxu0 0.0
  %374 = vmatprep.subr.mxu0 0.0
  %375 = vmatpush1.msra.mxu0 0.0
  %376 = vmatprep.subr.mxu0 0.0
  %377 = vmatpush1.msra.mxu0 0.0
  %378 = vmatprep.subr.mxu0 0.0
  %379 = vmatpush1.msra.mxu0 0.0
  %380 = vmatprep.subr.mxu0 0.0
  %381 = vmatpush1.msra.mxu0 0.0
  %382 = vmatprep.subr.mxu0 0.0
  %383 = vmatpush1.msra.mxu0 0.0
  %384 = vmatprep.subr.mxu0 0.0
  %385 = vmatpush1.msra.mxu0 0.0
  %386 = vmatprep.subr.mxu0 0.0
  %387 = vmatpush1.msra.mxu0 0.0
  %388 = vmatprep.subr.mxu0 0.0
  %389 = vmatpush1.msra.mxu0 0.0
  %390 = vmatprep.subr.mxu0 0.0
  %391 = vmatpush1.msra.mxu0 0.0
  %392 = vmatprep.subr.mxu0 0.0
  %393 = vmatpush1.msra.mxu0 0.0
  %394 = vmatprep.mubr.f32.mxu0 0.0
  %v395 = vand.u32 %v166, 4294901760
  %396 = vmatmul.mubr.f32.gmra.mrb[0].mxu0 %v395
  %v397 = vpop.f32.mrb[0].mxu0
  %v398 = vadd.f32 %v257, %v397
  %v399 = vpop.f32.mrb[0].mxu0
  %400 = vmatprep.mubr.f32.mxu0 0.0
  %v401 = vand.u32 %v169, 4294901760
  %402 = vmatmul.mubr.f32.gmra.mrb[0].mxu0 %v401
  %v403 = vpop.f32.mrb[0].mxu0
  %v404 = vadd.f32 %v267, %v403
  %v405 = vpop.f32.mrb[0].mxu0
  %406 = vmatprep.mubr.f32.mxu0 0.0
  %v407 = vand.u32 %v172, 4294901760
  %408 = vmatmul.mubr.f32.gmra.mrb[0].mxu0 %v407
  %v409 = vpop.f32.mrb[0].mxu0
  %v410 = vadd.f32 %v277, %v409
  %v411 = vpop.f32.mrb[0].mxu0
  %412 = vmatprep.mubr.f32.mxu0 0.0
  %v413 = vand.u32 %v175, 4294901760
  %414 = vmatmul.mubr.f32.gmra.mrb[0].mxu0 %v413
  %v415 = vpop.f32.mrb[0].mxu0
  %v416 = vadd.f32 %v287, %v415
  %v417 = vpop.f32.mrb[0].mxu0
  %418 = vdwg.mxu0
  %419 = vmatprep.subr.mxu0 0.0
  %v420 = vand.u32 %v144, 4294901760
  %v421 = vsub.f32 %v144, %v420
  %422 = vmatpush1.msra.mxu0 %v421
  %423 = vmatprep.subr.mxu0 0.0
  %v424 = vand.u32 %v145, 4294901760
  %v425 = vsub.f32 %v145, %v424
  %426 = vmatpush1.msra.mxu0 %v425
  %427 = vmatprep.subr.mxu0 0.0
  %v428 = vand.u32 %v146, 4294901760
  %v429 = vsub.f32 %v146, %v428
  %430 = vmatpush1.msra.mxu0 %v429
  %431 = vmatprep.subr.mxu0 0.0
  %v432 = vand.u32 %v147, 4294901760
  %v433 = vsub.f32 %v147, %v432
  %434 = vmatpush1.msra.mxu0 %v433
  %435 = vmatprep.subr.mxu0 0.0
  %v436 = vand.u32 %v148, 4294901760
  %v437 = vsub.f32 %v148, %v436
  %438 = vmatpush1.msra.mxu0 %v437
  %439 = vmatprep.subr.mxu0 0.0
  %v440 = vand.u32 %v149, 4294901760
  %v441 = vsub.f32 %v149, %v440
  %442 = vmatpush1.msra.mxu0 %v441
  %443 = vmatprep.subr.mxu0 0.0
  %v444 = vand.u32 %v150, 4294901760
  %v445 = vsub.f32 %v150, %v444
  %446 = vmatpush1.msra.mxu0 %v445
  %447 = vmatprep.subr.mxu0 0.0
  %v448 = vand.u32 %v151, 4294901760
  %v449 = vsub.f32 %v151, %v448
  %450 = vmatpush1.msra.mxu0 %v449
  %451 = vmatprep.subr.mxu0 0.0
  %452 = vmatpush1.msra.mxu0 0.0
  %453 = vmatprep.subr.mxu0 0.0
  %454 = vmatpush1.msra.mxu0 0.0
  %455 = vmatprep.subr.mxu0 0.0
  %456 = vmatpush1.msra.mxu0 0.0
  %457 = vmatprep.subr.mxu0 0.0
  %458 = vmatpush1.msra.mxu0 0.0
  %459 = vmatprep.subr.mxu0 0.0
  %460 = vmatpush1.msra.mxu0 0.0
  %461 = vmatprep.subr.mxu0 0.0
  %462 = vmatpush1.msra.mxu0 0.0
  %463 = vmatprep.subr.mxu0 0.0
  %464 = vmatpush1.msra.mxu0 0.0
  %465 = vmatprep.subr.mxu0 0.0
  %466 = vmatpush1.msra.mxu0 0.0
  %467 = vmatprep.subr.mxu0 0.0
  %468 = vmatpush1.msra.mxu0 0.0
  %469 = vmatprep.subr.mxu0 0.0
  %470 = vmatpush1.msra.mxu0 0.0
  %471 = vmatprep.subr.mxu0 0.0
  %472 = vmatpush1.msra.mxu0 0.0
  %473 = vmatprep.subr.mxu0 0.0
  %474 = vmatpush1.msra.mxu0 0.0
  %475 = vmatprep.subr.mxu0 0.0
  %476 = vmatpush1.msra.mxu0 0.0
  %477 = vmatprep.subr.mxu0 0.0
  %478 = vmatpush1.msra.mxu0 0.0
  %479 = vmatprep.subr.mxu0 0.0
  %480 = vmatpush1.msra.mxu0 0.0
  %481 = vmatprep.subr.mxu0 0.0
  %482 = vmatpush1.msra.mxu0 0.0
  %483 = vmatprep.subr.mxu0 0.0
  %484 = vmatpush1.msra.mxu0 0.0
  %485 = vmatprep.subr.mxu0 0.0
  %486 = vmatpush1.msra.mxu0 0.0
  %487 = vmatprep.subr.mxu0 0.0
  %488 = vmatpush1.msra.mxu0 0.0
  %489 = vmatprep.subr.mxu0 0.0
  %490 = vmatpush1.msra.mxu0 0.0
  %491 = vmatprep.subr.mxu0 0.0
  %492 = vmatpush1.msra.mxu0 0.0
  %493 = vmatprep.subr.mxu0 0.0
  %494 = vmatpush1.msra.mxu0 0.0
  %495 = vmatprep.subr.mxu0 0.0
  %496 = vmatpush1.msra.mxu0 0.0
  %497 = vmatprep.subr.mxu0 0.0
  %498 = vmatpush1.msra.mxu0 0.0
  %499 = vmatprep.mubr.f32.mxu0 0.0
  %v500 = vand.u32 %v166, 4294901760
  %v501 = vsub.f32 %v166, %v500
  %502 = vmatmul.mubr.f32.gmra.mrb[0].mxu0 %v501
  %v503 = vpop.f32.mrb[0].mxu0
  %v504 = vadd.f32 %v398, %v503
  %v505 = vpop.f32.mrb[0].mxu0
  %506 = vmatprep.mubr.f32.mxu0 0.0
  %v507 = vand.u32 %v169, 4294901760
  %v508 = vsub.f32 %v169, %v507
  %509 = vmatmul.mubr.f32.gmra.mrb[0].mxu0 %v508
  %v510 = vpop.f32.mrb[0].mxu0
  %v511 = vadd.f32 %v404, %v510
  %v512 = vpop.f32.mrb[0].mxu0
  %513 = vmatprep.mubr.f32.mxu0 0.0
  %v514 = vand.u32 %v172, 4294901760
  %v515 = vsub.f32 %v172, %v514
  %516 = vmatmul.mubr.f32.gmra.mrb[0].mxu0 %v515
  %v517 = vpop.f32.mrb[0].mxu0
  %v518 = vadd.f32 %v410, %v517
  %v519 = vpop.f32.mrb[0].mxu0
  %520 = vmatprep.mubr.f32.mxu0 0.0
  %v521 = vand.u32 %v175, 4294901760
  %v522 = vsub.f32 %v175, %v521
  %523 = vmatmul.mubr.f32.gmra.mrb[0].mxu0 %v522
  %v524 = vpop.f32.mrb[0].mxu0
  %v525 = vadd.f32 %v416, %v524
  %v526 = vpop.f32.mrb[0].mxu0
  %527 = vdwg.mxu0
  %528 = vmatprep.subr.mxu0 0.0
  %v529 = vand.u32 %v144, 4294901760
  %530 = vmatpush1.msra.mxu0 %v529
  %531 = vmatprep.subr.mxu0 0.0
  %v532 = vand.u32 %v145, 4294901760
  %533 = vmatpush1.msra.mxu0 %v532
  %534 = vmatprep.subr.mxu0 0.0
  %v535 = vand.u32 %v146, 4294901760
  %536 = vmatpush1.msra.mxu0 %v535
  %537 = vmatprep.subr.mxu0 0.0
  %v538 = vand.u32 %v147, 4294901760
  %539 = vmatpush1.msra.mxu0 %v538
  %540 = vmatprep.subr.mxu0 0.0
  %v541 = vand.u32 %v148, 4294901760
  %542 = vmatpush1.msra.mxu0 %v541
  %543 = vmatprep.subr.mxu0 0.0
  %v544 = vand.u32 %v149, 4294901760
  %545 = vmatpush1.msra.mxu0 %v544
  %546 = vmatprep.subr.mxu0 0.0
  %v547 = vand.u32 %v150, 4294901760
  %548 = vmatpush1.msra.mxu0 %v547
  %549 = vmatprep.subr.mxu0 0.0
  %v550 = vand.u32 %v151, 4294901760
  %551 = vmatpush1.msra.mxu0 %v550
  %552 = vmatprep.subr.mxu0 0.0
  %553 = vmatpush1.msra.mxu0 0.0
  %554 = vmatprep.subr.mxu0 0.0
  %555 = vmatpush1.msra.mxu0 0.0
  %556 = vmatprep.subr.mxu0 0.0
  %557 = vmatpush1.msra.mxu0 0.0
  %558 = vmatprep.subr.mxu0 0.0
  %559 = vmatpush1.msra.mxu0 0.0
  %560 = vmatprep.subr.mxu0 0.0
  %561 = vmatpush1.msra.mxu0 0.0
  %562 = vmatprep.subr.mxu0 0.0
  %563 = vmatpush1.msra.mxu0 0.0
  %564 = vmatprep.subr.mxu0 0.0
  %565 = vmatpush1.msra.mxu0 0.0
  %566 = vmatprep.subr.mxu0 0.0
  %567 = vmatpush1.msra.mxu0 0.0
  %568 = vmatprep.subr.mxu0 0.0
  %569 = vmatpush1.msra.mxu0 0.0
  %570 = vmatprep.subr.mxu0 0.0
  %571 = vmatpush1.msra.mxu0 0.0
  %572 = vmatprep.subr.mxu0 0.0
  %573 = vmatpush1.msra.mxu0 0.0
  %574 = vmatprep.subr.mxu0 0.0
  %575 = vmatpush1.msra.mxu0 0.0
  %576 = vmatprep.subr.mxu0 0.0
  %577 = vmatpush1.msra.mxu0 0.0
  %578 = vmatprep.subr.mxu0 0.0
  %579 = vmatpush1.msra.mxu0 0.0
  %580 = vmatprep.subr.mxu0 0.0
  %581 = vmatpush1.msra.mxu0 0.0
  %582 = vmatprep.subr.mxu0 0.0
  %583 = vmatpush1.msra.mxu0 0.0
  %584 = vmatprep.subr.mxu0 0.0
  %585 = vmatpush1.msra.mxu0 0.0
  %586 = vmatprep.subr.mxu0 0.0
  %587 = vmatpush1.msra.mxu0 0.0
  %588 = vmatprep.subr.mxu0 0.0
  %589 = vmatpush1.msra.mxu0 0.0
  %590 = vmatprep.subr.mxu0 0.0
  %591 = vmatpush1.msra.mxu0 0.0
  %592 = vmatprep.subr.mxu0 0.0
  %593 = vmatpush1.msra.mxu0 0.0
  %594 = vmatprep.subr.mxu0 0.0
  %595 = vmatpush1.msra.mxu0 0.0
  %596 = vmatprep.subr.mxu0 0.0
  %597 = vmatpush1.msra.mxu0 0.0
  %598 = vmatprep.subr.mxu0 0.0
  %599 = vmatpush1.msra.mxu0 0.0
  %600 = vmatprep.mubr.f32.mxu0 0.0
  %v601 = vand.u32 %v166, 4294901760
  %v602 = vsub.f32 %v166, %v601
  %v603 = vand.u32 %v602, 4294901760
  %604 = vmatmul.mubr.f32.gmra.mrb[0].mxu0 %v603
  %v605 = vpop.f32.mrb[0].mxu0
  %v606 = vadd.f32 %v504, %v605
  %v607 = vpop.f32.mrb[0].mxu0
  %608 = vmatprep.mubr.f32.mxu0 0.0
  %v609 = vand.u32 %v169, 4294901760
  %v610 = vsub.f32 %v169, %v609
  %v611 = vand.u32 %v610, 4294901760
  %612 = vmatmul.mubr.f32.gmra.mrb[0].mxu0 %v611
  %v613 = vpop.f32.mrb[0].mxu0
  %v614 = vadd.f32 %v511, %v613
  %v615 = vpop.f32.mrb[0].mxu0
  %616 = vmatprep.mubr.f32.mxu0 0.0
  %v617 = vand.u32 %v172, 4294901760
  %v618 = vsub.f32 %v172, %v617
  %v619 = vand.u32 %v618, 4294901760
  %620 = vmatmul.mubr.f32.gmra.mrb[0].mxu0 %v619
  %v621 = vpop.f32.mrb[0].mxu0
  %v622 = vadd.f32 %v518, %v621
  %v623 = vpop.f32.mrb[0].mxu0
  %624 = vmatprep.mubr.f32.mxu0 0.0
  %v625 = vand.u32 %v175, 4294901760
  %v626 = vsub.f32 %v175, %v625
  %v627 = vand.u32 %v626, 4294901760
  %628 = vmatmul.mubr.f32.gmra.mrb[0].mxu0 %v627
  %v629 = vpop.f32.mrb[0].mxu0
  %v630 = vadd.f32 %v525, %v629
  %v631 = vpop.f32.mrb[0].mxu0
  %632 = vdwg.mxu0
  %633 = vmatprep.subr.mxu0 0.0
  %v634 = vand.u32 %v144, 4294901760
  %v635 = vsub.f32 %v144, %v634
  %v636 = vand.u32 %v635, 4294901760
  %637 = vmatpush1.msra.mxu0 %v636
  %638 = vmatprep.subr.mxu0 0.0
  %v639 = vand.u32 %v145, 4294901760
  %v640 = vsub.f32 %v145, %v639
  %v641 = vand.u32 %v640, 4294901760
  %642 = vmatpush1.msra.mxu0 %v641
  %643 = vmatprep.subr.mxu0 0.0
  %v644 = vand.u32 %v146, 4294901760
  %v645 = vsub.f32 %v146, %v644
  %v646 = vand.u32 %v645, 4294901760
  %647 = vmatpush1.msra.mxu0 %v646
  %648 = vmatprep.subr.mxu0 0.0
  %v649 = vand.u32 %v147, 4294901760
  %v650 = vsub.f32 %v147, %v649
  %v651 = vand.u32 %v650, 4294901760
  %652 = vmatpush1.msra.mxu0 %v651
  %653 = vmatprep.subr.mxu0 0.0
  %v654 = vand.u32 %v148, 4294901760
  %v655 = vsub.f32 %v148, %v654
  %v656 = vand.u32 %v655, 4294901760
  %657 = vmatpush1.msra.mxu0 %v656
  %658 = vmatprep.subr.mxu0 0.0
  %v659 = vand.u32 %v149, 4294901760
  %v660 = vsub.f32 %v149, %v659
  %v661 = vand.u32 %v660, 4294901760
  %662 = vmatpush1.msra.mxu0 %v661
  %663 = vmatprep.subr.mxu0 0.0
  %v664 = vand.u32 %v150, 4294901760
  %v665 = vsub.f32 %v150, %v664
  %v666 = vand.u32 %v665, 4294901760
  %667 = vmatpush1.msra.mxu0 %v666
  %668 = vmatprep.subr.mxu0 0.0
  %v669 = vand.u32 %v151, 4294901760
  %v670 = vsub.f32 %v151, %v669
  %v671 = vand.u32 %v670, 4294901760
  %672 = vmatpush1.msra.mxu0 %v671
  %673 = vmatprep.subr.mxu0 0.0
  %674 = vmatpush1.msra.mxu0 0.0
  %675 = vmatprep.subr.mxu0 0.0
  %676 = vmatpush1.msra.mxu0 0.0
  %677 = vmatprep.subr.mxu0 0.0
  %678 = vmatpush1.msra.mxu0 0.0
  %679 = vmatprep.subr.mxu0 0.0
  %680 = vmatpush1.msra.mxu0 0.0
  %681 = vmatprep.subr.mxu0 0.0
  %682 = vmatpush1.msra.mxu0 0.0
  %683 = vmatprep.subr.mxu0 0.0
  %684 = vmatpush1.msra.mxu0 0.0
  %685 = vmatprep.subr.mxu0 0.0
  %686 = vmatpush1.msra.mxu0 0.0
  %687 = vmatprep.subr.mxu0 0.0
  %688 = vmatpush1.msra.mxu0 0.0
  %689 = vmatprep.subr.mxu0 0.0
  %690 = vmatpush1.msra.mxu0 0.0
  %691 = vmatprep.subr.mxu0 0.0
  %692 = vmatpush1.msra.mxu0 0.0
  %693 = vmatprep.subr.mxu0 0.0
  %694 = vmatpush1.msra.mxu0 0.0
  %695 = vmatprep.subr.mxu0 0.0
  %696 = vmatpush1.msra.mxu0 0.0
  %697 = vmatprep.subr.mxu0 0.0
  %698 = vmatpush1.msra.mxu0 0.0
  %699 = vmatprep.subr.mxu0 0.0
  %700 = vmatpush1.msra.mxu0 0.0
  %701 = vmatprep.subr.mxu0 0.0
  %702 = vmatpush1.msra.mxu0 0.0
  %703 = vmatprep.subr.mxu0 0.0
  %704 = vmatpush1.msra.mxu0 0.0
  %705 = vmatprep.subr.mxu0 0.0
  %706 = vmatpush1.msra.mxu0 0.0
  %707 = vmatprep.subr.mxu0 0.0
  %708 = vmatpush1.msra.mxu0 0.0
  %709 = vmatprep.subr.mxu0 0.0
  %710 = vmatpush1.msra.mxu0 0.0
  %711 = vmatprep.subr.mxu0 0.0
  %712 = vmatpush1.msra.mxu0 0.0
  %713 = vmatprep.subr.mxu0 0.0
  %714 = vmatpush1.msra.mxu0 0.0
  %715 = vmatprep.subr.mxu0 0.0
  %716 = vmatpush1.msra.mxu0 0.0
  %717 = vmatprep.subr.mxu0 0.0
  %718 = vmatpush1.msra.mxu0 0.0
  %719 = vmatprep.subr.mxu0 0.0
  %720 = vmatpush1.msra.mxu0 0.0
  %721 = vmatprep.mubr.f32.mxu0 0.0
  %v722 = vand.u32 %v166, 4294901760
  %723 = vmatmul.mubr.f32.gmra.mrb[0].mxu0 %v722
  %v724 = vpop.f32.mrb[0].mxu0
  %v725 = vadd.f32 %v606, %v724
  %v726 = vpop.f32.mrb[0].mxu0
  %727 = vmatprep.mubr.f32.mxu0 0.0
  %v728 = vand.u32 %v169, 4294901760
  %729 = vmatmul.mubr.f32.gmra.mrb[0].mxu0 %v728
  %v730 = vpop.f32.mrb[0].mxu0
  %v731 = vadd.f32 %v614, %v730
  %v732 = vpop.f32.mrb[0].mxu0
  %733 = vmatprep.mubr.f32.mxu0 0.0
  %v734 = vand.u32 %v172, 4294901760
  %735 = vmatmul.mubr.f32.gmra.mrb[0].mxu0 %v734
  %v736 = vpop.f32.mrb[0].mxu0
  %v737 = vadd.f32 %v622, %v736
  %v738 = vpop.f32.mrb[0].mxu0
  %739 = vmatprep.mubr.f32.mxu0 0.0
  %v740 = vand.u32 %v175, 4294901760
  %741 = vmatmul.mubr.f32.gmra.mrb[0].mxu0 %v740
  %v742 = vpop.f32.mrb[0].mxu0
  %v743 = vadd.f32 %v630, %v742
  %v744 = vpop.f32.mrb[0].mxu0
  %745 = vdwg.mxu0
  %746 = vmatprep.subr.mxu0 0.0
  %v747 = vand.u32 %v144, 4294901760
  %748 = vmatpush1.msra.mxu0 %v747
  %749 = vmatprep.subr.mxu0 0.0
  %v750 = vand.u32 %v145, 4294901760
  %751 = vmatpush1.msra.mxu0 %v750
  %752 = vmatprep.subr.mxu0 0.0
  %v753 = vand.u32 %v146, 4294901760
  %754 = vmatpush1.msra.mxu0 %v753
  %755 = vmatprep.subr.mxu0 0.0
  %v756 = vand.u32 %v147, 4294901760
  %757 = vmatpush1.msra.mxu0 %v756
  %758 = vmatprep.subr.mxu0 0.0
  %v759 = vand.u32 %v148, 4294901760
  %760 = vmatpush1.msra.mxu0 %v759
  %761 = vmatprep.subr.mxu0 0.0
  %v762 = vand.u32 %v149, 4294901760
  %763 = vmatpush1.msra.mxu0 %v762
  %764 = vmatprep.subr.mxu0 0.0
  %v765 = vand.u32 %v150, 4294901760
  %766 = vmatpush1.msra.mxu0 %v765
  %767 = vmatprep.subr.mxu0 0.0
  %v768 = vand.u32 %v151, 4294901760
  %769 = vmatpush1.msra.mxu0 %v768
  %770 = vmatprep.subr.mxu0 0.0
  %771 = vmatpush1.msra.mxu0 0.0
  %772 = vmatprep.subr.mxu0 0.0
  %773 = vmatpush1.msra.mxu0 0.0
  %774 = vmatprep.subr.mxu0 0.0
  %775 = vmatpush1.msra.mxu0 0.0
  %776 = vmatprep.subr.mxu0 0.0
  %777 = vmatpush1.msra.mxu0 0.0
  %778 = vmatprep.subr.mxu0 0.0
  %779 = vmatpush1.msra.mxu0 0.0
  %780 = vmatprep.subr.mxu0 0.0
  %781 = vmatpush1.msra.mxu0 0.0
  %782 = vmatprep.subr.mxu0 0.0
  %783 = vmatpush1.msra.mxu0 0.0
  %784 = vmatprep.subr.mxu0 0.0
  %785 = vmatpush1.msra.mxu0 0.0
  %786 = vmatprep.subr.mxu0 0.0
  %787 = vmatpush1.msra.mxu0 0.0
  %788 = vmatprep.subr.mxu0 0.0
  %789 = vmatpush1.msra.mxu0 0.0
  %790 = vmatprep.subr.mxu0 0.0
  %791 = vmatpush1.msra.mxu0 0.0
  %792 = vmatprep.subr.mxu0 0.0
  %793 = vmatpush1.msra.mxu0 0.0
  %794 = vmatprep.subr.mxu0 0.0
  %795 = vmatpush1.msra.mxu0 0.0
  %796 = vmatprep.subr.mxu0 0.0
  %797 = vmatpush1.msra.mxu0 0.0
  %798 = vmatprep.subr.mxu0 0.0
  %799 = vmatpush1.msra.mxu0 0.0
  %800 = vmatprep.subr.mxu0 0.0
  %801 = vmatpush1.msra.mxu0 0.0
  %802 = vmatprep.subr.mxu0 0.0
  %803 = vmatpush1.msra.mxu0 0.0
  %804 = vmatprep.subr.mxu0 0.0
  %805 = vmatpush1.msra.mxu0 0.0
  %806 = vmatprep.subr.mxu0 0.0
  %807 = vmatpush1.msra.mxu0 0.0
  %808 = vmatprep.subr.mxu0 0.0
  %809 = vmatpush1.msra.mxu0 0.0
  %810 = vmatprep.subr.mxu0 0.0
  %811 = vmatpush1.msra.mxu0 0.0
  %812 = vmatprep.subr.mxu0 0.0
  %813 = vmatpush1.msra.mxu0 0.0
  %814 = vmatprep.subr.mxu0 0.0
  %815 = vmatpush1.msra.mxu0 0.0
  %816 = vmatprep.subr.mxu0 0.0
  %817 = vmatpush1.msra.mxu0 0.0
  %818 = vmatprep.mubr.f32.mxu0 0.0
  %v819 = vand.u32 %v166, 4294901760
  %820 = vmatmul.mubr.f32.gmra.mrb[0].mxu0 %v819
  %v821 = vpop.f32.mrb[0].mxu0
  %v822 = vadd.f32 %v725, %v821
  %v823 = vpop.f32.mrb[0].mxu0
  %824 = vmatprep.mubr.f32.mxu0 0.0
  %v825 = vand.u32 %v169, 4294901760
  %826 = vmatmul.mubr.f32.gmra.mrb[0].mxu0 %v825
  %v827 = vpop.f32.mrb[0].mxu0
  %v828 = vadd.f32 %v731, %v827
  %v829 = vpop.f32.mrb[0].mxu0
  %830 = vmatprep.mubr.f32.mxu0 0.0
  %v831 = vand.u32 %v172, 4294901760
  %832 = vmatmul.mubr.f32.gmra.mrb[0].mxu0 %v831
  %v833 = vpop.f32.mrb[0].mxu0
  %v834 = vadd.f32 %v737, %v833
  %v835 = vpop.f32.mrb[0].mxu0
  %836 = vmatprep.mubr.f32.mxu0 0.0
  %v837 = vand.u32 %v175, 4294901760
  %838 = vmatmul.mubr.f32.gmra.mrb[0].mxu0 %v837
  %v839 = vpop.f32.mrb[0].mxu0
  %v840 = vadd.f32 %v743, %v839
  %v841 = vpop.f32.mrb[0].mxu0
  %842 = vdwg.mxu0
  %vm843 = vcmask 261120
  %844 = vst.msk [vmem:[%s3] sm:$0xff] %vm843, %v822
  %845 = vst.msk [vmem:[%s3 + $0x8] sm:$0xff] %vm843, %v828
  %846 = vst.msk [vmem:[%s3 + $0x10] sm:$0xff] %vm843, %v834
  %847 = vst.msk [vmem:[%s3 + $0x18] sm:$0xff] %vm843, %v840
  %v848 = vld [vmem:[%s2] sm:$0xff]
  %v849 = vld [vmem:[%s2 + $0x8] sm:$0xff]
  %v850 = vld [vmem:[%s2 + $0x10] sm:$0xff]
  %v851 = vld [vmem:[%s2 + $0x18] sm:$0xff]
  %v852 = vld [vmem:[%s2 + $0x20] sm:$0xff]
  %v853 = vld [vmem:[%s2 + $0x28] sm:$0xff]
  %v854 = vld [vmem:[%s2 + $0x30] sm:$0xff]
  %v855 = vld [vmem:[%s2 + $0x38] sm:$0xff]
  %856 = vmatprep.subr.mxu0 0.0
  %v857 = vand.u32 %v848, 4294901760
  %858 = vmatpush1.msra.mxu0 %v857
  %859 = vmatprep.subr.mxu0 0.0
  %v860 = vand.u32 %v849, 4294901760
  %861 = vmatpush1.msra.mxu0 %v860
  %862 = vmatprep.subr.mxu0 0.0
  %v863 = vand.u32 %v850, 4294901760
  %864 = vmatpush1.msra.mxu0 %v863
  %865 = vmatprep.subr.mxu0 0.0
  %v866 = vand.u32 %v851, 4294901760
  %867 = vmatpush1.msra.mxu0 %v866
  %868 = vmatprep.subr.mxu0 0.0
  %v869 = vand.u32 %v852, 4294901760
  %870 = vmatpush1.msra.mxu0 %v869
  %871 = vmatprep.subr.mxu0 0.0
  %v872 = vand.u32 %v853, 4294901760
  %873 = vmatpush1.msra.mxu0 %v872
  %874 = vmatprep.subr.mxu0 0.0
  %v875 = vand.u32 %v854, 4294901760
  %876 = vmatpush1.msra.mxu0 %v875
  %877 = vmatprep.subr.mxu0 0.0
  %v878 = vand.u32 %v855, 4294901760
  %879 = vmatpush1.msra.mxu0 %v878
  %880 = vmatprep.subr.mxu0 0.0
  %881 = vmatpush1.msra.mxu0 0.0
  %882 = vmatprep.subr.mxu0 0.0
  %883 = vmatpush1.msra.mxu0 0.0
  %884 = vmatprep.subr.mxu0 0.0
  %885 = vmatpush1.msra.mxu0 0.0
  %886 = vmatprep.subr.mxu0 0.0
  %887 = vmatpush1.msra.mxu0 0.0
  %888 = vmatprep.subr.mxu0 0.0
  %889 = vmatpush1.msra.mxu0 0.0
  %890 = vmatprep.subr.mxu0 0.0
  %891 = vmatpush1.msra.mxu0 0.0
  %892 = vmatprep.subr.mxu0 0.0
  %893 = vmatpush1.msra.mxu0 0.0
  %894 = vmatprep.subr.mxu0 0.0
  %895 = vmatpush1.msra.mxu0 0.0
  %896 = vmatprep.subr.mxu0 0.0
  %897 = vmatpush1.msra.mxu0 0.0
  %898 = vmatprep.subr.mxu0 0.0
  %899 = vmatpush1.msra.mxu0 0.0
  %900 = vmatprep.subr.mxu0 0.0
  %901 = vmatpush1.msra.mxu0 0.0
  %902 = vmatprep.subr.mxu0 0.0
  %903 = vmatpush1.msra.mxu0 0.0
  %904 = vmatprep.subr.mxu0 0.0
  %905 = vmatpush1.msra.mxu0 0.0
  %906 = vmatprep.subr.mxu0 0.0
  %907 = vmatpush1.msra.mxu0 0.0
  %908 = vmatprep.subr.mxu0 0.0
  %909 = vmatpush1.msra.mxu0 0.0
  %910 = vmatprep.subr.mxu0 0.0
  %911 = vmatpush1.msra.mxu0 0.0
  %912 = vmatprep.subr.mxu0 0.0
  %913 = vmatpush1.msra.mxu0 0.0
  %914 = vmatprep.subr.mxu0 0.0
  %915 = vmatpush1.msra.mxu0 0.0
  %916 = vmatprep.subr.mxu0 0.0
  %917 = vmatpush1.msra.mxu0 0.0
  %918 = vmatprep.subr.mxu0 0.0
  %919 = vmatpush1.msra.mxu0 0.0
  %920 = vmatprep.subr.mxu0 0.0
  %921 = vmatpush1.msra.mxu0 0.0
  %922 = vmatprep.subr.mxu0 0.0
  %923 = vmatpush1.msra.mxu0 0.0
  %924 = vmatprep.subr.mxu0 0.0
  %925 = vmatpush1.msra.mxu0 0.0
  %926 = vmatprep.subr.mxu0 0.0
  %927 = vmatpush1.msra.mxu0 0.0
  %928 = vmatprep.mubr.f32.mxu0 0.0
  %v929 = vand.u32 %v166, 4294901760
  %v930 = vsub.f32 %v166, %v929
  %v931 = vand.u32 %v930, 4294901760
  %v932 = vsub.f32 %v930, %v931
  %v933 = vand.u32 %v932, 4294901760
  %934 = vmatmul.mubr.f32.gmra.mrb[0].mxu0 %v933
  %v935 = vpop.f32.mrb[0].mxu0
  %v936 = vadd.f32 1.0, %v935
  %v937 = vpop.f32.mrb[0].mxu0
  %938 = vmatprep.mubr.f32.mxu0 0.0
  %v939 = vand.u32 %v169, 4294901760
  %v940 = vsub.f32 %v169, %v939
  %v941 = vand.u32 %v940, 4294901760
  %v942 = vsub.f32 %v940, %v941
  %v943 = vand.u32 %v942, 4294901760
  %944 = vmatmul.mubr.f32.gmra.mrb[0].mxu0 %v943
  %v945 = vpop.f32.mrb[0].mxu0
  %v946 = vadd.f32 1.0, %v945
  %v947 = vpop.f32.mrb[0].mxu0
  %948 = vmatprep.mubr.f32.mxu0 0.0
  %v949 = vand.u32 %v172, 4294901760
  %v950 = vsub.f32 %v172, %v949
  %v951 = vand.u32 %v950, 4294901760
  %v952 = vsub.f32 %v950, %v951
  %v953 = vand.u32 %v952, 4294901760
  %954 = vmatmul.mubr.f32.gmra.mrb[0].mxu0 %v953
  %v955 = vpop.f32.mrb[0].mxu0
  %v956 = vadd.f32 1.0, %v955
  %v957 = vpop.f32.mrb[0].mxu0
  %958 = vmatprep.mubr.f32.mxu0 0.0
  %v959 = vand.u32 %v175, 4294901760
  %v960 = vsub.f32 %v175, %v959
  %v961 = vand.u32 %v960, 4294901760
  %v962 = vsub.f32 %v960, %v961
  %v963 = vand.u32 %v962, 4294901760
  %964 = vmatmul.mubr.f32.gmra.mrb[0].mxu0 %v963
  %v965 = vpop.f32.mrb[0].mxu0
  %v966 = vadd.f32 1.0, %v965
  %v967 = vpop.f32.mrb[0].mxu0
  %968 = vdwg.mxu0
  %969 = vmatprep.subr.mxu0 0.0
  %v970 = vand.u32 %v848, 4294901760
  %v971 = vsub.f32 %v848, %v970
  %v972 = vand.u32 %v971, 4294901760
  %v973 = vsub.f32 %v971, %v972
  %v974 = vand.u32 %v973, 4294901760
  %975 = vmatpush1.msra.mxu0 %v974
  %976 = vmatprep.subr.mxu0 0.0
  %v977 = vand.u32 %v849, 4294901760
  %v978 = vsub.f32 %v849, %v977
  %v979 = vand.u32 %v978, 4294901760
  %v980 = vsub.f32 %v978, %v979
  %v981 = vand.u32 %v980, 4294901760
  %982 = vmatpush1.msra.mxu0 %v981
  %983 = vmatprep.subr.mxu0 0.0
  %v984 = vand.u32 %v850, 4294901760
  %v985 = vsub.f32 %v850, %v984
  %v986 = vand.u32 %v985, 4294901760
  %v987 = vsub.f32 %v985, %v986
  %v988 = vand.u32 %v987, 4294901760
  %989 = vmatpush1.msra.mxu0 %v988
  %990 = vmatprep.subr.mxu0 0.0
  %v991 = vand.u32 %v851, 4294901760
  %v992 = vsub.f32 %v851, %v991
  %v993 = vand.u32 %v992, 4294901760
  %v994 = vsub.f32 %v992, %v993
  %v995 = vand.u32 %v994, 4294901760
  %996 = vmatpush1.msra.mxu0 %v995
  %997 = vmatprep.subr.mxu0 0.0
  %v998 = vand.u32 %v852, 4294901760
  %v999 = vsub.f32 %v852, %v998
  %v1000 = vand.u32 %v999, 4294901760
  %v1001 = vsub.f32 %v999, %v1000
  %v1002 = vand.u32 %v1001, 4294901760
  %1003 = vmatpush1.msra.mxu0 %v1002
  %1004 = vmatprep.subr.mxu0 0.0
  %v1005 = vand.u32 %v853, 4294901760
  %v1006 = vsub.f32 %v853, %v1005
  %v1007 = vand.u32 %v1006, 4294901760
  %v1008 = vsub.f32 %v1006, %v1007
  %v1009 = vand.u32 %v1008, 4294901760
  %1010 = vmatpush1.msra.mxu0 %v1009
  %1011 = vmatprep.subr.mxu0 0.0
  %v1012 = vand.u32 %v854, 4294901760
  %v1013 = vsub.f32 %v854, %v1012
  %v1014 = vand.u32 %v1013, 4294901760
  %v1015 = vsub.f32 %v1013, %v1014
  %v1016 = vand.u32 %v1015, 4294901760
  %1017 = vmatpush1.msra.mxu0 %v1016
  %1018 = vmatprep.subr.mxu0 0.0
  %v1019 = vand.u32 %v855, 4294901760
  %v1020 = vsub.f32 %v855, %v1019
  %v1021 = vand.u32 %v1020, 4294901760
  %v1022 = vsub.f32 %v1020, %v1021
  %v1023 = vand.u32 %v1022, 4294901760
  %1024 = vmatpush1.msra.mxu0 %v1023
  %1025 = vmatprep.subr.mxu0 0.0
  %1026 = vmatpush1.msra.mxu0 0.0
  %1027 = vmatprep.subr.mxu0 0.0
  %1028 = vmatpush1.msra.mxu0 0.0
  %1029 = vmatprep.subr.mxu0 0.0
  %1030 = vmatpush1.msra.mxu0 0.0
  %1031 = vmatprep.subr.mxu0 0.0
  %1032 = vmatpush1.msra.mxu0 0.0
  %1033 = vmatprep.subr.mxu0 0.0
  %1034 = vmatpush1.msra.mxu0 0.0
  %1035 = vmatprep.subr.mxu0 0.0
  %1036 = vmatpush1.msra.mxu0 0.0
  %1037 = vmatprep.subr.mxu0 0.0
  %1038 = vmatpush1.msra.mxu0 0.0
  %1039 = vmatprep.subr.mxu0 0.0
  %1040 = vmatpush1.msra.mxu0 0.0
  %1041 = vmatprep.subr.mxu0 0.0
  %1042 = vmatpush1.msra.mxu0 0.0
  %1043 = vmatprep.subr.mxu0 0.0
  %1044 = vmatpush1.msra.mxu0 0.0
  %1045 = vmatprep.subr.mxu0 0.0
  %1046 = vmatpush1.msra.mxu0 0.0
  %1047 = vmatprep.subr.mxu0 0.0
  %1048 = vmatpush1.msra.mxu0 0.0
  %1049 = vmatprep.subr.mxu0 0.0
  %1050 = vmatpush1.msra.mxu0 0.0
  %1051 = vmatprep.subr.mxu0 0.0
  %1052 = vmatpush1.msra.mxu0 0.0
  %1053 = vmatprep.subr.mxu0 0.0
  %1054 = vmatpush1.msra.mxu0 0.0
  %1055 = vmatprep.subr.mxu0 0.0
  %1056 = vmatpush1.msra.mxu0 0.0
  %1057 = vmatprep.subr.mxu0 0.0
  %1058 = vmatpush1.msra.mxu0 0.0
  %1059 = vmatprep.subr.mxu0 0.0
  %1060 = vmatpush1.msra.mxu0 0.0
  %1061 = vmatprep.subr.mxu0 0.0
  %1062 = vmatpush1.msra.mxu0 0.0
  %1063 = vmatprep.subr.mxu0 0.0
  %1064 = vmatpush1.msra.mxu0 0.0
  %1065 = vmatprep.subr.mxu0 0.0
  %1066 = vmatpush1.msra.mxu0 0.0
  %1067 = vmatprep.subr.mxu0 0.0
  %1068 = vmatpush1.msra.mxu0 0.0
  %1069 = vmatprep.subr.mxu0 0.0
  %1070 = vmatpush1.msra.mxu0 0.0
  %1071 = vmatprep.subr.mxu0 0.0
  %1072 = vmatpush1.msra.mxu0 0.0
  %1073 = vmatprep.mubr.f32.mxu0 0.0
  %v1074 = vand.u32 %v166, 4294901760
  %1075 = vmatmul.mubr.f32.gmra.mrb[0].mxu0 %v1074
  %v1076 = vpop.f32.mrb[0].mxu0
  %v1077 = vadd.f32 %v936, %v1076
  %v1078 = vpop.f32.mrb[0].mxu0
  %1079 = vmatprep.mubr.f32.mxu0 0.0
  %v1080 = vand.u32 %v169, 4294901760
  %1081 = vmatmul.mubr.f32.gmra.mrb[0].mxu0 %v1080
  %v1082 = vpop.f32.mrb[0].mxu0
  %v1083 = vadd.f32 %v946, %v1082
  %v1084 = vpop.f32.mrb[0].mxu0
  %1085 = vmatprep.mubr.f32.mxu0 0.0
  %v1086 = vand.u32 %v172, 4294901760
  %1087 = vmatmul.mubr.f32.gmra.mrb[0].mxu0 %v1086
  %v1088 = vpop.f32.mrb[0].mxu0
  %v1089 = vadd.f32 %v956, %v1088
  %v1090 = vpop.f32.mrb[0].mxu0
  %1091 = vmatprep.mubr.f32.mxu0 0.0
  %v1092 = vand.u32 %v175, 4294901760
  %1093 = vmatmul.mubr.f32.gmra.mrb[0].mxu0 %v1092
  %v1094 = vpop.f32.mrb[0].mxu0
  %v1095 = vadd.f32 %v966, %v1094
  %v1096 = vpop.f32.mrb[0].mxu0
  %1097 = vdwg.mxu0
  %1098 = vmatprep.subr.mxu0 0.0
  %v1099 = vand.u32 %v848, 4294901760
  %v1100 = vsub.f32 %v848, %v1099
  %1101 = vmatpush1.msra.mxu0 %v1100
  %1102 = vmatprep.subr.mxu0 0.0
  %v1103 = vand.u32 %v849, 4294901760
  %v1104 = vsub.f32 %v849, %v1103
  %1105 = vmatpush1.msra.mxu0 %v1104
  %1106 = vmatprep.subr.mxu0 0.0
  %v1107 = vand.u32 %v850, 4294901760
  %v1108 = vsub.f32 %v850, %v1107
  %1109 = vmatpush1.msra.mxu0 %v1108
  %1110 = vmatprep.subr.mxu0 0.0
  %v1111 = vand.u32 %v851, 4294901760
  %v1112 = vsub.f32 %v851, %v1111
  %1113 = vmatpush1.msra.mxu0 %v1112
  %1114 = vmatprep.subr.mxu0 0.0
  %v1115 = vand.u32 %v852, 4294901760
  %v1116 = vsub.f32 %v852, %v1115
  %1117 = vmatpush1.msra.mxu0 %v1116
  %1118 = vmatprep.subr.mxu0 0.0
  %v1119 = vand.u32 %v853, 4294901760
  %v1120 = vsub.f32 %v853, %v1119
  %1121 = vmatpush1.msra.mxu0 %v1120
  %1122 = vmatprep.subr.mxu0 0.0
  %v1123 = vand.u32 %v854, 4294901760
  %v1124 = vsub.f32 %v854, %v1123
  %1125 = vmatpush1.msra.mxu0 %v1124
  %1126 = vmatprep.subr.mxu0 0.0
  %v1127 = vand.u32 %v855, 4294901760
  %v1128 = vsub.f32 %v855, %v1127
  %1129 = vmatpush1.msra.mxu0 %v1128
  %1130 = vmatprep.subr.mxu0 0.0
  %1131 = vmatpush1.msra.mxu0 0.0
  %1132 = vmatprep.subr.mxu0 0.0
  %1133 = vmatpush1.msra.mxu0 0.0
  %1134 = vmatprep.subr.mxu0 0.0
  %1135 = vmatpush1.msra.mxu0 0.0
  %1136 = vmatprep.subr.mxu0 0.0
  %1137 = vmatpush1.msra.mxu0 0.0
  %1138 = vmatprep.subr.mxu0 0.0
  %1139 = vmatpush1.msra.mxu0 0.0
  %1140 = vmatprep.subr.mxu0 0.0
  %1141 = vmatpush1.msra.mxu0 0.0
  %1142 = vmatprep.subr.mxu0 0.0
  %1143 = vmatpush1.msra.mxu0 0.0
  %1144 = vmatprep.subr.mxu0 0.0
  %1145 = vmatpush1.msra.mxu0 0.0
  %1146 = vmatprep.subr.mxu0 0.0
  %1147 = vmatpush1.msra.mxu0 0.0
  %1148 = vmatprep.subr.mxu0 0.0
  %1149 = vmatpush1.msra.mxu0 0.0
  %1150 = vmatprep.subr.mxu0 0.0
  %1151 = vmatpush1.msra.mxu0 0.0
  %1152 = vmatprep.subr.mxu0 0.0
  %1153 = vmatpush1.msra.mxu0 0.0
  %1154 = vmatprep.subr.mxu0 0.0
  %1155 = vmatpush1.msra.mxu0 0.0
  %1156 = vmatprep.subr.mxu0 0.0
  %1157 = vmatpush1.msra.mxu0 0.0
  %1158 = vmatprep.subr.mxu0 0.0
  %1159 = vmatpush1.msra.mxu0 0.0
  %1160 = vmatprep.subr.mxu0 0.0
  %1161 = vmatpush1.msra.mxu0 0.0
  %1162 = vmatprep.subr.mxu0 0.0
  %1163 = vmatpush1.msra.mxu0 0.0
  %1164 = vmatprep.subr.mxu0 0.0
  %1165 = vmatpush1.msra.mxu0 0.0
  %1166 = vmatprep.subr.mxu0 0.0
  %1167 = vmatpush1.msra.mxu0 0.0
  %1168 = vmatprep.subr.mxu0 0.0
  %1169 = vmatpush1.msra.mxu0 0.0
  %1170 = vmatprep.subr.mxu0 0.0
  %1171 = vmatpush1.msra.mxu0 0.0
  %1172 = vmatprep.subr.mxu0 0.0
  %1173 = vmatpush1.msra.mxu0 0.0
  %1174 = vmatprep.subr.mxu0 0.0
  %1175 = vmatpush1.msra.mxu0 0.0
  %1176 = vmatprep.subr.mxu0 0.0
  %1177 = vmatpush1.msra.mxu0 0.0
  %1178 = vmatprep.mubr.f32.mxu0 0.0
  %v1179 = vand.u32 %v166, 4294901760
  %v1180 = vsub.f32 %v166, %v1179
  %1181 = vmatmul.mubr.f32.gmra.mrb[0].mxu0 %v1180
  %v1182 = vpop.f32.mrb[0].mxu0
  %v1183 = vadd.f32 %v1077, %v1182
  %v1184 = vpop.f32.mrb[0].mxu0
  %1185 = vmatprep.mubr.f32.mxu0 0.0
  %v1186 = vand.u32 %v169, 4294901760
  %v1187 = vsub.f32 %v169, %v1186
  %1188 = vmatmul.mubr.f32.gmra.mrb[0].mxu0 %v1187
  %v1189 = vpop.f32.mrb[0].mxu0
  %v1190 = vadd.f32 %v1083, %v1189
  %v1191 = vpop.f32.mrb[0].mxu0
  %1192 = vmatprep.mubr.f32.mxu0 0.0
  %v1193 = vand.u32 %v172, 4294901760
  %v1194 = vsub.f32 %v172, %v1193
  %1195 = vmatmul.mubr.f32.gmra.mrb[0].mxu0 %v1194
  %v1196 = vpop.f32.mrb[0].mxu0
  %v1197 = vadd.f32 %v1089, %v1196
  %v1198 = vpop.f32.mrb[0].mxu0
  %1199 = vmatprep.mubr.f32.mxu0 0.0
  %v1200 = vand.u32 %v175, 4294901760
  %v1201 = vsub.f32 %v175, %v1200
  %1202 = vmatmul.mubr.f32.gmra.mrb[0].mxu0 %v1201
  %v1203 = vpop.f32.mrb[0].mxu0
  %v1204 = vadd.f32 %v1095, %v1203
  %v1205 = vpop.f32.mrb[0].mxu0
  %1206 = vdwg.mxu0
  %1207 = vmatprep.subr.mxu0 0.0
  %v1208 = vand.u32 %v848, 4294901760
  %1209 = vmatpush1.msra.mxu0 %v1208
  %1210 = vmatprep.subr.mxu0 0.0
  %v1211 = vand.u32 %v849, 4294901760
  %1212 = vmatpush1.msra.mxu0 %v1211
  %1213 = vmatprep.subr.mxu0 0.0
  %v1214 = vand.u32 %v850, 4294901760
  %1215 = vmatpush1.msra.mxu0 %v1214
  %1216 = vmatprep.subr.mxu0 0.0
  %v1217 = vand.u32 %v851, 4294901760
  %1218 = vmatpush1.msra.mxu0 %v1217
  %1219 = vmatprep.subr.mxu0 0.0
  %v1220 = vand.u32 %v852, 4294901760
  %1221 = vmatpush1.msra.mxu0 %v1220
  %1222 = vmatprep.subr.mxu0 0.0
  %v1223 = vand.u32 %v853, 4294901760
  %1224 = vmatpush1.msra.mxu0 %v1223
  %1225 = vmatprep.subr.mxu0 0.0
  %v1226 = vand.u32 %v854, 4294901760
  %1227 = vmatpush1.msra.mxu0 %v1226
  %1228 = vmatprep.subr.mxu0 0.0
  %v1229 = vand.u32 %v855, 4294901760
  %1230 = vmatpush1.msra.mxu0 %v1229
  %1231 = vmatprep.subr.mxu0 0.0
  %1232 = vmatpush1.msra.mxu0 0.0
  %1233 = vmatprep.subr.mxu0 0.0
  %1234 = vmatpush1.msra.mxu0 0.0
  %1235 = vmatprep.subr.mxu0 0.0
  %1236 = vmatpush1.msra.mxu0 0.0
  %1237 = vmatprep.subr.mxu0 0.0
  %1238 = vmatpush1.msra.mxu0 0.0
  %1239 = vmatprep.subr.mxu0 0.0
  %1240 = vmatpush1.msra.mxu0 0.0
  %1241 = vmatprep.subr.mxu0 0.0
  %1242 = vmatpush1.msra.mxu0 0.0
  %1243 = vmatprep.subr.mxu0 0.0
  %1244 = vmatpush1.msra.mxu0 0.0
  %1245 = vmatprep.subr.mxu0 0.0
  %1246 = vmatpush1.msra.mxu0 0.0
  %1247 = vmatprep.subr.mxu0 0.0
  %1248 = vmatpush1.msra.mxu0 0.0
  %1249 = vmatprep.subr.mxu0 0.0
  %1250 = vmatpush1.msra.mxu0 0.0
  %1251 = vmatprep.subr.mxu0 0.0
  %1252 = vmatpush1.msra.mxu0 0.0
  %1253 = vmatprep.subr.mxu0 0.0
  %1254 = vmatpush1.msra.mxu0 0.0
  %1255 = vmatprep.subr.mxu0 0.0
  %1256 = vmatpush1.msra.mxu0 0.0
  %1257 = vmatprep.subr.mxu0 0.0
  %1258 = vmatpush1.msra.mxu0 0.0
  %1259 = vmatprep.subr.mxu0 0.0
  %1260 = vmatpush1.msra.mxu0 0.0
  %1261 = vmatprep.subr.mxu0 0.0
  %1262 = vmatpush1.msra.mxu0 0.0
  %1263 = vmatprep.subr.mxu0 0.0
  %1264 = vmatpush1.msra.mxu0 0.0
  %1265 = vmatprep.subr.mxu0 0.0
  %1266 = vmatpush1.msra.mxu0 0.0
  %1267 = vmatprep.subr.mxu0 0.0
  %1268 = vmatpush1.msra.mxu0 0.0
  %1269 = vmatprep.subr.mxu0 0.0
  %1270 = vmatpush1.msra.mxu0 0.0
  %1271 = vmatprep.subr.mxu0 0.0
  %1272 = vmatpush1.msra.mxu0 0.0
  %1273 = vmatprep.subr.mxu0 0.0
  %1274 = vmatpush1.msra.mxu0 0.0
  %1275 = vmatprep.subr.mxu0 0.0
  %1276 = vmatpush1.msra.mxu0 0.0
  %1277 = vmatprep.subr.mxu0 0.0
  %1278 = vmatpush1.msra.mxu0 0.0
  %1279 = vmatprep.mubr.f32.mxu0 0.0
  %v1280 = vand.u32 %v166, 4294901760
  %v1281 = vsub.f32 %v166, %v1280
  %v1282 = vand.u32 %v1281, 4294901760
  %1283 = vmatmul.mubr.f32.gmra.mrb[0].mxu0 %v1282
  %v1284 = vpop.f32.mrb[0].mxu0
  %v1285 = vadd.f32 %v1183, %v1284
  %v1286 = vpop.f32.mrb[0].mxu0
  %1287 = vmatprep.mubr.f32.mxu0 0.0
  %v1288 = vand.u32 %v169, 4294901760
  %v1289 = vsub.f32 %v169, %v1288
  %v1290 = vand.u32 %v1289, 4294901760
  %1291 = vmatmul.mubr.f32.gmra.mrb[0].mxu0 %v1290
  %v1292 = vpop.f32.mrb[0].mxu0
  %v1293 = vadd.f32 %v1190, %v1292
  %v1294 = vpop.f32.mrb[0].mxu0
  %1295 = vmatprep.mubr.f32.mxu0 0.0
  %v1296 = vand.u32 %v172, 4294901760
  %v1297 = vsub.f32 %v172, %v1296
  %v1298 = vand.u32 %v1297, 4294901760
  %1299 = vmatmul.mubr.f32.gmra.mrb[0].mxu0 %v1298
  %v1300 = vpop.f32.mrb[0].mxu0
  %v1301 = vadd.f32 %v1197, %v1300
  %v1302 = vpop.f32.mrb[0].mxu0
  %1303 = vmatprep.mubr.f32.mxu0 0.0
  %v1304 = vand.u32 %v175, 4294901760
  %v1305 = vsub.f32 %v175, %v1304
  %v1306 = vand.u32 %v1305, 4294901760
  %1307 = vmatmul.mubr.f32.gmra.mrb[0].mxu0 %v1306
  %v1308 = vpop.f32.mrb[0].mxu0
  %v1309 = vadd.f32 %v1204, %v1308
  %v1310 = vpop.f32.mrb[0].mxu0
  %1311 = vdwg.mxu0
  %1312 = vmatprep.subr.mxu0 0.0
  %v1313 = vand.u32 %v848, 4294901760
  %v1314 = vsub.f32 %v848, %v1313
  %v1315 = vand.u32 %v1314, 4294901760
  %1316 = vmatpush1.msra.mxu0 %v1315
  %1317 = vmatprep.subr.mxu0 0.0
  %v1318 = vand.u32 %v849, 4294901760
  %v1319 = vsub.f32 %v849, %v1318
  %v1320 = vand.u32 %v1319, 4294901760
  %1321 = vmatpush1.msra.mxu0 %v1320
  %1322 = vmatprep.subr.mxu0 0.0
  %v1323 = vand.u32 %v850, 4294901760
  %v1324 = vsub.f32 %v850, %v1323
  %v1325 = vand.u32 %v1324, 4294901760
  %1326 = vmatpush1.msra.mxu0 %v1325
  %1327 = vmatprep.subr.mxu0 0.0
  %v1328 = vand.u32 %v851, 4294901760
  %v1329 = vsub.f32 %v851, %v1328
  %v1330 = vand.u32 %v1329, 4294901760
  %1331 = vmatpush1.msra.mxu0 %v1330
  %1332 = vmatprep.subr.mxu0 0.0
  %v1333 = vand.u32 %v852, 4294901760
  %v1334 = vsub.f32 %v852, %v1333
  %v1335 = vand.u32 %v1334, 4294901760
  %1336 = vmatpush1.msra.mxu0 %v1335
  %1337 = vmatprep.subr.mxu0 0.0
  %v1338 = vand.u32 %v853, 4294901760
  %v1339 = vsub.f32 %v853, %v1338
  %v1340 = vand.u32 %v1339, 4294901760
  %1341 = vmatpush1.msra.mxu0 %v1340
  %1342 = vmatprep.subr.mxu0 0.0
  %v1343 = vand.u32 %v854, 4294901760
  %v1344 = vsub.f32 %v854, %v1343
  %v1345 = vand.u32 %v1344, 4294901760
  %1346 = vmatpush1.msra.mxu0 %v1345
  %1347 = vmatprep.subr.mxu0 0.0
  %v1348 = vand.u32 %v855, 4294901760
  %v1349 = vsub.f32 %v855, %v1348
  %v1350 = vand.u32 %v1349, 4294901760
  %1351 = vmatpush1.msra.mxu0 %v1350
  %1352 = vmatprep.subr.mxu0 0.0
  %1353 = vmatpush1.msra.mxu0 0.0
  %1354 = vmatprep.subr.mxu0 0.0
  %1355 = vmatpush1.msra.mxu0 0.0
  %1356 = vmatprep.subr.mxu0 0.0
  %1357 = vmatpush1.msra.mxu0 0.0
  %1358 = vmatprep.subr.mxu0 0.0
  %1359 = vmatpush1.msra.mxu0 0.0
  %1360 = vmatprep.subr.mxu0 0.0
  %1361 = vmatpush1.msra.mxu0 0.0
  %1362 = vmatprep.subr.mxu0 0.0
  %1363 = vmatpush1.msra.mxu0 0.0
  %1364 = vmatprep.subr.mxu0 0.0
  %1365 = vmatpush1.msra.mxu0 0.0
  %1366 = vmatprep.subr.mxu0 0.0
  %1367 = vmatpush1.msra.mxu0 0.0
  %1368 = vmatprep.subr.mxu0 0.0
  %1369 = vmatpush1.msra.mxu0 0.0
  %1370 = vmatprep.subr.mxu0 0.0
  %1371 = vmatpush1.msra.mxu0 0.0
  %1372 = vmatprep.subr.mxu0 0.0
  %1373 = vmatpush1.msra.mxu0 0.0
  %1374 = vmatprep.subr.mxu0 0.0
  %1375 = vmatpush1.msra.mxu0 0.0
  %1376 = vmatprep.subr.mxu0 0.0
  %1377 = vmatpush1.msra.mxu0 0.0
  %1378 = vmatprep.subr.mxu0 0.0
  %1379 = vmatpush1.msra.mxu0 0.0
  %1380 = vmatprep.subr.mxu0 0.0
  %1381 = vmatpush1.msra.mxu0 0.0
  %1382 = vmatprep.subr.mxu0 0.0
  %1383 = vmatpush1.msra.mxu0 0.0
  %1384 = vmatprep.subr.mxu0 0.0
  %1385 = vmatpush1.msra.mxu0 0.0
  %1386 = vmatprep.subr.mxu0 0.0
  %1387 = vmatpush1.msra.mxu0 0.0
  %1388 = vmatprep.subr.mxu0 0.0
  %1389 = vmatpush1.msra.mxu0 0.0
  %1390 = vmatprep.subr.mxu0 0.0
  %1391 = vmatpush1.msra.mxu0 0.0
  %1392 = vmatprep.subr.mxu0 0.0
  %1393 = vmatpush1.msra.mxu0 0.0
  %1394 = vmatprep.subr.mxu0 0.0
  %1395 = vmatpush1.msra.mxu0 0.0
  %1396 = vmatprep.subr.mxu0 0.0
  %1397 = vmatpush1.msra.mxu0 0.0
  %1398 = vmatprep.subr.mxu0 0.0
  %1399 = vmatpush1.msra.mxu0 0.0
  %1400 = vmatprep.mubr.f32.mxu0 0.0
  %v1401 = vand.u32 %v166, 4294901760
  %1402 = vmatmul.mubr.f32.gmra.mrb[0].mxu0 %v1401
  %v1403 = vpop.f32.mrb[0].mxu0
  %v1404 = vadd.f32 %v1285, %v1403
  %v1405 = vpop.f32.mrb[0].mxu0
  %1406 = vmatprep.mubr.f32.mxu0 0.0
  %v1407 = vand.u32 %v169, 4294901760
  %1408 = vmatmul.mubr.f32.gmra.mrb[0].mxu0 %v1407
  %v1409 = vpop.f32.mrb[0].mxu0
  %v1410 = vadd.f32 %v1293, %v1409
  %v1411 = vpop.f32.mrb[0].mxu0
  %1412 = vmatprep.mubr.f32.mxu0 0.0
  %v1413 = vand.u32 %v172, 4294901760
  %1414 = vmatmul.mubr.f32.gmra.mrb[0].mxu0 %v1413
  %v1415 = vpop.f32.mrb[0].mxu0
  %v1416 = vadd.f32 %v1301, %v1415
  %v1417 = vpop.f32.mrb[0].mxu0
  %1418 = vmatprep.mubr.f32.mxu0 0.0
  %v1419 = vand.u32 %v175, 4294901760
  %1420 = vmatmul.mubr.f32.gmra.mrb[0].mxu0 %v1419
  %v1421 = vpop.f32.mrb[0].mxu0
  %v1422 = vadd.f32 %v1309, %v1421
  %v1423 = vpop.f32.mrb[0].mxu0
  %1424 = vdwg.mxu0
  %1425 = vmatprep.subr.mxu0 0.0
  %v1426 = vand.u32 %v848, 4294901760
  %1427 = vmatpush1.msra.mxu0 %v1426
  %1428 = vmatprep.subr.mxu0 0.0
  %v1429 = vand.u32 %v849, 4294901760
  %1430 = vmatpush1.msra.mxu0 %v1429
  %1431 = vmatprep.subr.mxu0 0.0
  %v1432 = vand.u32 %v850, 4294901760
  %1433 = vmatpush1.msra.mxu0 %v1432
  %1434 = vmatprep.subr.mxu0 0.0
  %v1435 = vand.u32 %v851, 4294901760
  %1436 = vmatpush1.msra.mxu0 %v1435
  %1437 = vmatprep.subr.mxu0 0.0
  %v1438 = vand.u32 %v852, 4294901760
  %1439 = vmatpush1.msra.mxu0 %v1438
  %1440 = vmatprep.subr.mxu0 0.0
  %v1441 = vand.u32 %v853, 4294901760
  %1442 = vmatpush1.msra.mxu0 %v1441
  %1443 = vmatprep.subr.mxu0 0.0
  %v1444 = vand.u32 %v854, 4294901760
  %1445 = vmatpush1.msra.mxu0 %v1444
  %1446 = vmatprep.subr.mxu0 0.0
  %v1447 = vand.u32 %v855, 4294901760
  %1448 = vmatpush1.msra.mxu0 %v1447
  %1449 = vmatprep.subr.mxu0 0.0
  %1450 = vmatpush1.msra.mxu0 0.0
  %1451 = vmatprep.subr.mxu0 0.0
  %1452 = vmatpush1.msra.mxu0 0.0
  %1453 = vmatprep.subr.mxu0 0.0
  %1454 = vmatpush1.msra.mxu0 0.0
  %1455 = vmatprep.subr.mxu0 0.0
  %1456 = vmatpush1.msra.mxu0 0.0
  %1457 = vmatprep.subr.mxu0 0.0
  %1458 = vmatpush1.msra.mxu0 0.0
  %1459 = vmatprep.subr.mxu0 0.0
  %1460 = vmatpush1.msra.mxu0 0.0
  %1461 = vmatprep.subr.mxu0 0.0
  %1462 = vmatpush1.msra.mxu0 0.0
  %1463 = vmatprep.subr.mxu0 0.0
  %1464 = vmatpush1.msra.mxu0 0.0
  %1465 = vmatprep.subr.mxu0 0.0
  %1466 = vmatpush1.msra.mxu0 0.0
  %1467 = vmatprep.subr.mxu0 0.0
  %1468 = vmatpush1.msra.mxu0 0.0
  %1469 = vmatprep.subr.mxu0 0.0
  %1470 = vmatpush1.msra.mxu0 0.0
  %1471 = vmatprep.subr.mxu0 0.0
  %1472 = vmatpush1.msra.mxu0 0.0
  %1473 = vmatprep.subr.mxu0 0.0
  %1474 = vmatpush1.msra.mxu0 0.0
  %1475 = vmatprep.subr.mxu0 0.0
  %1476 = vmatpush1.msra.mxu0 0.0
  %1477 = vmatprep.subr.mxu0 0.0
  %1478 = vmatpush1.msra.mxu0 0.0
  %1479 = vmatprep.subr.mxu0 0.0
  %1480 = vmatpush1.msra.mxu0 0.0
  %1481 = vmatprep.subr.mxu0 0.0
  %1482 = vmatpush1.msra.mxu0 0.0
  %1483 = vmatprep.subr.mxu0 0.0
  %1484 = vmatpush1.msra.mxu0 0.0
  %1485 = vmatprep.subr.mxu0 0.0
  %1486 = vmatpush1.msra.mxu0 0.0
  %1487 = vmatprep.subr.mxu0 0.0
  %1488 = vmatpush1.msra.mxu0 0.0
  %1489 = vmatprep.subr.mxu0 0.0
  %1490 = vmatpush1.msra.mxu0 0.0
  %1491 = vmatprep.subr.mxu0 0.0
  %1492 = vmatpush1.msra.mxu0 0.0
  %1493 = vmatprep.subr.mxu0 0.0
  %1494 = vmatpush1.msra.mxu0 0.0
  %1495 = vmatprep.subr.mxu0 0.0
  %1496 = vmatpush1.msra.mxu0 0.0
  %1497 = vmatprep.mubr.f32.mxu0 0.0
  %v1498 = vand.u32 %v166, 4294901760
  %1499 = vmatmul.mubr.f32.gmra.mrb[0].mxu0 %v1498
  %v1500 = vpop.f32.mrb[0].mxu0
  %v1501 = vadd.f32 %v1404, %v1500
  %v1502 = vpop.f32.mrb[0].mxu0
  %1503 = vmatprep.mubr.f32.mxu0 0.0
  %v1504 = vand.u32 %v169, 4294901760
  %1505 = vmatmul.mubr.f32.gmra.mrb[0].mxu0 %v1504
  %v1506 = vpop.f32.mrb[0].mxu0
  %v1507 = vadd.f32 %v1410, %v1506
  %v1508 = vpop.f32.mrb[0].mxu0
  %1509 = vmatprep.mubr.f32.mxu0 0.0
  %v1510 = vand.u32 %v172, 4294901760
  %1511 = vmatmul.mubr.f32.gmra.mrb[0].mxu0 %v1510
  %v1512 = vpop.f32.mrb[0].mxu0
  %v1513 = vadd.f32 %v1416, %v1512
  %v1514 = vpop.f32.mrb[0].mxu0
  %1515 = vmatprep.mubr.f32.mxu0 0.0
  %v1516 = vand.u32 %v175, 4294901760
  %1517 = vmatmul.mubr.f32.gmra.mrb[0].mxu0 %v1516
  %v1518 = vpop.f32.mrb[0].mxu0
  %v1519 = vadd.f32 %v1422, %v1518
  %v1520 = vpop.f32.mrb[0].mxu0
  %1521 = vdwg.mxu0
  %vm1522 = vcmask 7168
  %1523 = vst.msk [vmem:[%s4] sm:$0xff] %vm1522, %v1501
  %1524 = vst.msk [vmem:[%s4 + $0x8] sm:$0xff] %vm1522, %v1507
  %1525 = vst.msk [vmem:[%s4 + $0x10] sm:$0xff] %vm1522, %v1513
  %1526 = vst.msk [vmem:[%s4 + $0x18] sm:$0xff] %vm1522, %v1519
  // Predicated region
  $region14: #{simple_gcn_forward.2} parent=0 // pred_check
    _
  $region15: #{simple_gcn_forward.2} parent=0 // pred_check_branch
    %1528 = sbr.rel (0) target = $region17
  $region16: #{simple_gcn_forward.2} parent=0 // pred_region
    _
  $region17: #{simple_gcn_forward.2} parent=0 // pred_fallthru
    _
  // Predicated region
  $region18: #{simple_gcn_forward.2} parent=0 // pred_check
    _
  $region19: #{simple_gcn_forward.2} parent=0 // pred_check_branch
    %1530 = sbr.rel (0) target = $region21
  $region20: #{simple_gcn_forward.2} parent=0 // pred_region
    _
  $region21: #{simple_gcn_forward.2} parent=0 // pred_fallthru
    _
  // Predicated region
  $region22: #{simple_gcn_forward.2} parent=0 // pred_check
    _
  $region23: #{simple_gcn_forward.2} parent=0 // pred_check_branch
    %1532 = sbr.rel (0) target = $region25
  $region24: #{simple_gcn_forward.2} parent=0 // pred_region
    _
  $region25: #{simple_gcn_forward.2} parent=0 // pred_fallthru
    _
  // Predicated region
  $region26: #{simple_gcn_forward.2} parent=0 // pred_check
    _
  $region27: #{simple_gcn_forward.2} parent=0 // pred_check_branch
    %1534 = sbr.rel (0) target = $region29
  $region28: #{simple_gcn_forward.2} parent=0 // pred_region
    _
  $region29: #{simple_gcn_forward.2} parent=0 // pred_fallthru
    _

// kernel: simple_gcn_forward.3
$region0: #{simple_gcn_forward.3}
  #allocation0 [shape = 'u32[]', space=smem, size = 0x4, offset = 0x4, fixed_abs, tag = 'smem constant byte address 0x4 - core index']
  #allocation1 [shape = 'u32[144,128]{1,0:T(1,128)}', space=vmem, size = 0x12000, scoped, tag = 'internal scratch']
  %s0 = inlined_call_operand.vmem [shape: bf16[32,32], index: 0, kind: input, shape index: {}]
  %s1 = inlined_call_operand.vmem [shape: f32[32,128], index: 1, kind: input, shape index: {}]
  %s2 = inlined_call_operand.vmem [shape: bf16[128,128], index: 2, kind: input, shape index: {}]
  %s3 = inlined_call_operand.vmem [shape: bf16[128,256], index: 3, kind: input, shape index: {}]
  %s4 = inlined_call_operand.vmem [shape: f32[1,256], index: 4, kind: input, shape index: {}]
  %s5 = inlined_call_operand.vmem [shape: f32[32,256], index: 5, kind: output, shape index: {}]
  %s6 = sld [smem:[#allocation0]]
  $region53: #{simple_gcn_forward.3} parent=0
    _
  %s8 = ssub.s32 1, %s6
  %s9 = scalar_select 0, %s8, %s6
  loop: start=0, step=1, limit=4
  $region2: #{simple_gcn_forward.3} parent=0 // loop_pre_header
    _
  $region3: #{simple_gcn_forward.3} parent=0 // loop_header
    %s11 = sphi 0, %s15
    %p12 = scmp.ge.s32.totalorder %s11, 4
    %s21 = sphi 0, %s23
    %s24 = sphi 0, %s21
    %s25 = sphi 0, %s24
    %s41 = sphi 0, %s25
    %s45 = sphi 0, %s45
    %s47 = sphi 0, %s45
    %s48 = sphi 0, %s47
    %s62 = sphi 0, %s48
    %s66 = sphi 0, %s66
    %s68 = sphi 0, %s66
    %s69 = sphi 0, %s68
    %s83 = sphi 0, %s69
    %s87 = sphi 0, %s87
    %s89 = sphi 0, %s87
    %s90 = sphi 0, %s89
    %s104 = sphi 0, %s90
    %s108 = sphi 0, %s108
    %s110 = sphi 0, %s108
    %s111 = sphi 0, %s110
    %s125 = sphi 0, %s111
    %s131 = sphi 0, %s133
    %s134 = sphi 0, %s131
    %s135 = sphi 0, %s134
    %s151 = sphi 0, %s135
  $region4: #{simple_gcn_forward.3} parent=0 // loop_header_branch
    %14 = sbr.rel (%p12) target = $region8
  $region5: #{simple_gcn_forward.3} parent=0 // loop_body
    %s16 = ssub.s32 %s11, 1
    %s17 = ssub.s32 %s11, 2
    %s18 = sadd.s32 %s11, 1
    %s19 = ssub.s32 %s11, %s18
    %p20 = scmp.eq.s32.totalorder %s19, 0
    %s22 = sadd.s32 %s21, 1
    %s23 = scalar_select %p20, %s21, %s22
    %p26 = pneg %p20
    %p27 = scmp.eq.s32.totalorder %s11, 1
    %p28 = por %p26, %p27
    %p29 = scmp.ne.s32.totalorder %s21, %s24
    %p30 = scmp.eq.s32.totalorder %s11, 0
    %p31 = por %p29, %p30
    %p32 = scmp.ne.s32.totalorder %s21, %s24
    %p33 = scmp.eq.s32.totalorder %s16, 1
    %p34 = por %p32, %p33
    %p35 = scmp.ne.s32.totalorder %s24, %s25
    %p36 = scmp.eq.s32.totalorder %s16, 0
    %p37 = por %p35, %p36
    %p38 = scmp.ne.s32.totalorder %s24, %s25
    %p39 = scmp.eq.s32.totalorder %s17, 1
    %p40 = por %p38, %p39
    %p42 = scmp.ne.s32.totalorder %s25, %s41
    %p43 = scmp.eq.s32.totalorder %s17, 0
    %p44 = por %p42, %p43
    %s46 = sadd.s32 %s45, 1
    %p49 = scmp.eq.s32.totalorder %s11, 1
    %p50 = scmp.ne.s32.totalorder %s45, %s47
    %p51 = scmp.eq.s32.totalorder %s11, 0
    %p52 = por %p50, %p51
    %p53 = scmp.ne.s32.totalorder %s45, %s47
    %p54 = scmp.eq.s32.totalorder %s16, 1
    %p55 = por %p53, %p54
    %p56 = scmp.ne.s32.totalorder %s47, %s48
    %p57 = scmp.eq.s32.totalorder %s16, 0
    %p58 = por %p56, %p57
    %p59 = scmp.ne.s32.totalorder %s47, %s48
    %p60 = scmp.eq.s32.totalorder %s17, 1
    %p61 = por %p59, %p60
    %p63 = scmp.ne.s32.totalorder %s48, %s62
    %p64 = scmp.eq.s32.totalorder %s17, 0
    %p65 = por %p63, %p64
    %s67 = sadd.s32 %s66, 1
    %p70 = scmp.eq.s32.totalorder %s11, 1
    %p71 = scmp.ne.s32.totalorder %s66, %s68
    %p72 = scmp.eq.s32.totalorder %s11, 0
    %p73 = por %p71, %p72
    %p74 = scmp.ne.s32.totalorder %s66, %s68
    %p75 = scmp.eq.s32.totalorder %s16, 1
    %p76 = por %p74, %p75
    %p77 = scmp.ne.s32.totalorder %s68, %s69
    %p78 = scmp.eq.s32.totalorder %s16, 0
    %p79 = por %p77, %p78
    %p80 = scmp.ne.s32.totalorder %s68, %s69
    %p81 = scmp.eq.s32.totalorder %s17, 1
    %p82 = por %p80, %p81
    %p84 = scmp.ne.s32.totalorder %s69, %s83
    %p85 = scmp.eq.s32.totalorder %s17, 0
    %p86 = por %p84, %p85
    %s88 = sadd.s32 %s87, 1
    %p91 = scmp.eq.s32.totalorder %s11, 1
    %p92 = scmp.ne.s32.totalorder %s87, %s89
    %p93 = scmp.eq.s32.totalorder %s11, 0
    %p94 = por %p92, %p93
    %p95 = scmp.ne.s32.totalorder %s87, %s89
    %p96 = scmp.eq.s32.totalorder %s16, 1
    %p97 = por %p95, %p96
    %p98 = scmp.ne.s32.totalorder %s89, %s90
    %p99 = scmp.eq.s32.totalorder %s16, 0
    %p100 = por %p98, %p99
    %p101 = scmp.ne.s32.totalorder %s89, %s90
    %p102 = scmp.eq.s32.totalorder %s17, 1
    %p103 = por %p101, %p102
    %p105 = scmp.ne.s32.totalorder %s90, %s104
    %p106 = scmp.eq.s32.totalorder %s17, 0
    %p107 = por %p105, %p106
    %s109 = sadd.s32 %s108, 1
    %p112 = scmp.eq.s32.totalorder %s11, 1
    %p113 = scmp.ne.s32.totalorder %s108, %s110
    %p114 = scmp.eq.s32.totalorder %s11, 0
    %p115 = por %p113, %p114
    %p116 = scmp.ne.s32.totalorder %s108, %s110
    %p117 = scmp.eq.s32.totalorder %s16, 1
    %p118 = por %p116, %p117
    %p119 = scmp.ne.s32.totalorder %s110, %s111
    %p120 = scmp.eq.s32.totalorder %s16, 0
    %p121 = por %p119, %p120
    %p122 = scmp.ne.s32.totalorder %s110, %s111
    %p123 = scmp.eq.s32.totalorder %s17, 1
    %p124 = por %p122, %p123
    %p126 = scmp.ne.s32.totalorder %s111, %s125
    %p127 = scmp.eq.s32.totalorder %s17, 0
    %p128 = por %p126, %p127
    %s129 = ssub.s32 %s11, %s18
    %p130 = scmp.eq.s32.totalorder %s129, 0
    %s132 = sadd.s32 %s131, 1
    %s133 = scalar_select %p130, %s131, %s132
    %p136 = pneg %p130
    %p137 = scmp.eq.s32.totalorder %s11, 1
    %p138 = por %p136, %p137
    %p139 = scmp.ne.s32.totalorder %s131, %s134
    %p140 = scmp.eq.s32.totalorder %s11, 0
    %p141 = por %p139, %p140
    %p142 = scmp.ne.s32.totalorder %s131, %s134
    %p143 = scmp.eq.s32.totalorder %s16, 1
    %p144 = por %p142, %p143
    %p145 = scmp.ne.s32.totalorder %s134, %s135
    %p146 = scmp.eq.s32.totalorder %s16, 0
    %p147 = por %p145, %p146
    %p148 = scmp.ne.s32.totalorder %s134, %s135
    %p149 = scmp.eq.s32.totalorder %s17, 1
    %p150 = por %p148, %p149
    %p152 = scmp.ne.s32.totalorder %s135, %s151
    %p153 = scmp.eq.s32.totalorder %s17, 0
    %p154 = por %p152, %p153
    %p155 = scmp.le.s32.totalorder 1, %s11
    %p156 = scmp.lt.s32.totalorder %s11, 3
    %p157 = pnand %p155, %p156
    %p158 = pneg %p157
    // Predicated region
    $region9: #{simple_gcn_forward.3} parent=5 // pred_check
      _
    $region10: #{simple_gcn_forward.3} parent=5 // pred_check_branch
      %160 = sbr.rel (%p157) target = $region12
    $region11: #{simple_gcn_forward.3} parent=5 // pred_region
      %s161 = ssub.s32 %s11, 1
      // Predicated region
      $region13: #{simple_gcn_forward.3} parent=11 // pred_check
        %p162 = pneg %p58
      $region14: #{simple_gcn_forward.3} parent=11 // pred_check_branch
        %164 = sbr.rel (%p162) target = $region16
      $region15: #{simple_gcn_forward.3} parent=11 // pred_region
        _
      $region16: #{simple_gcn_forward.3} parent=11 // pred_fallthru
        _
      // Predicated region
      $region17: #{simple_gcn_forward.3} parent=11 // pred_check
        %p165 = pneg %p79
      $region18: #{simple_gcn_forward.3} parent=11 // pred_check_branch
        %167 = sbr.rel (%p165) target = $region20
      $region19: #{simple_gcn_forward.3} parent=11 // pred_region
        _
      $region20: #{simple_gcn_forward.3} parent=11 // pred_fallthru
        _
      // Predicated region
      $region21: #{simple_gcn_forward.3} parent=11 // pred_check
        %p168 = pneg %p100
      $region22: #{simple_gcn_forward.3} parent=11 // pred_check_branch
        %170 = sbr.rel (%p168) target = $region24
      $region23: #{simple_gcn_forward.3} parent=11 // pred_region
        _
      $region24: #{simple_gcn_forward.3} parent=11 // pred_fallthru
        _
      // Predicated region
      $region25: #{simple_gcn_forward.3} parent=11 // pred_check
        %p171 = pneg %p121
      $region26: #{simple_gcn_forward.3} parent=11 // pred_check_branch
        %173 = sbr.rel (%p171) target = $region28
      $region27: #{simple_gcn_forward.3} parent=11 // pred_region
        _
      $region28: #{simple_gcn_forward.3} parent=11 // pred_fallthru
        _
    $region12: #{simple_gcn_forward.3} parent=5 // pred_fallthru
      _
    %p174 = scmp.lt.s32.totalorder %s11, 2
    // Predicated region
    $region29: #{simple_gcn_forward.3} parent=5 // pred_check
      %p175 = pneg %p174
    $region30: #{simple_gcn_forward.3} parent=5 // pred_check_branch
      %177 = sbr.rel (%p175) target = $region32
    $region31: #{simple_gcn_forward.3} parent=5 // pred_region
      // Predicated region
      $region33: #{simple_gcn_forward.3} parent=31 // pred_check
        %p178 = pneg %p31
      $region34: #{simple_gcn_forward.3} parent=31 // pred_check_branch
        %180 = sbr.rel (%p178) target = $region36
      $region35: #{simple_gcn_forward.3} parent=31 // pred_region
        %s181 = smul.u32 2, %s11
        %p182 = scmp.lt.s32.totalorder %s181, 3
        %s183 = scalar_select %p182, %s181, 3
        %s184 = smul.addr %s183, 4
        %s185 = scalar_lea.vmem %s0, %s184
        %s186 = smul.u32 2, %s11
      $region36: #{simple_gcn_forward.3} parent=31 // pred_fallthru
        _
    $region32: #{simple_gcn_forward.3} parent=5 // pred_fallthru
      _
    %p187 = scmp.le.s32.totalorder 1, %s11
    %p188 = scmp.lt.s32.totalorder %s11, 3
    %p189 = pnand %p187, %p188
    %p190 = pneg %p189
    // Predicated region
    $region37: #{simple_gcn_forward.3} parent=5 // pred_check
      _
    $region38: #{simple_gcn_forward.3} parent=5 // pred_check_branch
      %192 = sbr.rel (%p189) target = $region40
    $region39: #{simple_gcn_forward.3} parent=5 // pred_region
      %s193 = ssub.s32 %s11, 1
      %s194 = smul.u32 2, %s16
      %p195 = scmp.lt.s32.totalorder %s194, 3
      %s196 = scalar_select %p195, %s194, 3
      %s197 = smul.addr %s196, 4
      %s198 = scalar_lea.vmem %s0, %s197
      %p199 = pneg %p37
      %p200 = pneg %p34
      %p201 = pneg %p58
      %p202 = pneg %p55
      %p203 = pneg %p79
      %p204 = pneg %p76
      %p205 = pneg %p100
      %p206 = pneg %p97
      %p207 = pneg %p121
      %p208 = pneg %p118
      %p209 = pneg %p147
      %p210 = pneg %p144
      %s211 = smul.u32 2, %s16
      %p212 = scmp.lt.s32.totalorder %s211, 3
      %s213 = scalar_select %p212, %s211, 3
      %s214 = smul.addr %s213, 2
      %s215 = smul.addr %s214, 8
      %s216 = scalar_lea.vmem %s5, %s215
      %s217 = smul.u32 2, %s16
      %p218 = scmp.lt.s32.totalorder %s217, 3
      %s219 = scalar_select %p218, %s217, 3
      %s220 = smul.addr %s219, 4
      %s221 = scalar_lea.vmem %s0, %s220
      %s222 = smul.u32 2, %s16
      %s223 = smul.u32 2, %s16
      %p224 = scmp.lt.s32.totalorder %s223, 3
      %s225 = scalar_select %p224, %s223, 3
      %s226 = smul.addr %s225, 2
      %s227 = smul.addr %s226, 8
      %s228 = scalar_lea.vmem %s5, %s227
      %s229 = smul.u32 2, %s16
      %v231 = vld [vmem:[%s1] sm:$0xff]
      %v232 = vld [vmem:[%s1 + $0x8] sm:$0xff]
      %v233 = vld [vmem:[%s1 + $0x10] sm:$0xff]
      %v234 = vld [vmem:[%s1 + $0x18] sm:$0xff]
      %v235 = vmul.f32 %v231, %v231
      %v236 = vmul.f32 %v232, %v232
      %v237 = vmul.f32 %v233, %v233
      %v238 = vmul.f32 %v234, %v234
      %v239 = vpack.c.bf16 %v236, %v235
      %v240 = vpack.c.bf16 %v238, %v237
      %v241 = vld [vmem:[%s2] sm:$0xf]
      %v242 = vld [vmem:[%s2 + $0x4] sm:$0xf]
      %v243 = vld [vmem:[%s2 + $0x8] sm:$0xf]
      %v244 = vld [vmem:[%s2 + $0xc] sm:$0xf]
      %v245 = vld [vmem:[%s2 + $0x10] sm:$0xf]
      %v246 = vld [vmem:[%s2 + $0x14] sm:$0xf]
      %v247 = vld [vmem:[%s2 + $0x18] sm:$0xf]
      %v248 = vld [vmem:[%s2 + $0x1c] sm:$0xf]
      %v249 = vld [vmem:[%s2 + $0x20] sm:$0xf]
      %v250 = vld [vmem:[%s2 + $0x24] sm:$0xf]
      %v251 = vld [vmem:[%s2 + $0x28] sm:$0xf]
      %v252 = vld [vmem:[%s2 + $0x2c] sm:$0xf]
      %v253 = vld [vmem:[%s2 + $0x30] sm:$0xf]
      %v254 = vld [vmem:[%s2 + $0x34] sm:$0xf]
      %v255 = vld [vmem:[%s2 + $0x38] sm:$0xf]
      %v256 = vld [vmem:[%s2 + $0x3c] sm:$0xf]
      %v273 = vunpack.c.l.b16 %v241
      %v274 = vunpack.c.l.b16 %v242
      %v275 = vunpack.c.l.b16 %v243
      %v276 = vunpack.c.l.b16 %v244
      %v277 = vunpack.c.l.b16 %v245
      %v278 = vunpack.c.l.b16 %v246
      %v279 = vunpack.c.l.b16 %v247
      %v280 = vunpack.c.l.b16 %v248
      %v281 = vunpack.c.l.b16 %v249
      %v282 = vunpack.c.l.b16 %v250
      %v283 = vunpack.c.l.b16 %v251
      %v284 = vunpack.c.l.b16 %v252
      %v285 = vunpack.c.l.b16 %v253
      %v286 = vunpack.c.l.b16 %v254
      %v287 = vunpack.c.l.b16 %v255
      %v288 = vunpack.c.l.b16 %v256
      %v289 = vpack.c.b16 %v274, %v273
      %v290 = vpack.c.b16 %v276, %v275
      %v291 = vpack.c.b16 %v278, %v277
      %v292 = vpack.c.b16 %v280, %v279
      %v293 = vpack.c.b16 %v282, %v281
      %v294 = vpack.c.b16 %v284, %v283
      %v295 = vpack.c.b16 %v286, %v285
      %v296 = vpack.c.b16 %v288, %v287
      %305 = vmatprep.subr.bf16.mxu0 0
      %306 = vmatpush1.bf16.msra.mxu0 %v289
      %307 = vmatprep.subr.bf16.mxu0 0
      %308 = vmatpush1.bf16.msra.mxu0 %v290
      %309 = vmatprep.subr.bf16.mxu0 0
      %310 = vmatpush1.bf16.msra.mxu0 %v291
      %311 = vmatprep.subr.bf16.mxu0 0
      %312 = vmatpush1.bf16.msra.mxu0 %v292
      %313 = vmatprep.subr.bf16.mxu0 0
      %314 = vmatpush1.bf16.msra.mxu0 %v293
      %315 = vmatprep.subr.bf16.mxu0 0
      %316 = vmatpush1.bf16.msra.mxu0 %v294
      %317 = vmatprep.subr.bf16.mxu0 0
      %318 = vmatpush1.bf16.msra.mxu0 %v295
      %319 = vmatprep.subr.bf16.mxu0 0
      %320 = vmatpush1.bf16.msra.mxu0 %v296
      %321 = vmatprep.subr.bf16.mxu0 0
      %322 = vmatpush1.bf16.msra.mxu0 0
      %323 = vmatprep.subr.bf16.mxu0 0
      %324 = vmatpush1.bf16.msra.mxu0 0
      %325 = vmatprep.subr.bf16.mxu0 0
      %326 = vmatpush1.bf16.msra.mxu0 0
      %327 = vmatprep.subr.bf16.mxu0 0
      %328 = vmatpush1.bf16.msra.mxu0 0
      %329 = vmatprep.subr.bf16.mxu0 0
      %330 = vmatpush1.bf16.msra.mxu0 0
      %331 = vmatprep.subr.bf16.mxu0 0
      %332 = vmatpush1.bf16.msra.mxu0 0
      %333 = vmatprep.subr.bf16.mxu0 0
      %334 = vmatpush1.bf16.msra.mxu0 0
      %335 = vmatprep.subr.bf16.mxu0 0
      %336 = vmatpush1.bf16.msra.mxu0 0
      %337 = vmatprep.mubr.bf16.mxu0 0
      %338 = vmatmul.mubr.bf16.gmra.mrb[0].mxu0 %v239
      %v339 = vpop.f32.mrb[0].mxu0
      %v340 = vadd.f32 0.0, %v339
      %v341 = vpop.f32.mrb[0].mxu0
      %v342 = vpop.f32.mrb[0].mxu0
      %v343 = vadd.f32 0.0, %v342
      %v344 = vpop.f32.mrb[0].mxu0
      %345 = vmatprep.mubr.bf16.mxu0 0
      %346 = vmatmul.mubr.bf16.gmra.mrb[0].mxu0 %v240
      %v347 = vpop.f32.mrb[0].mxu0
      %v348 = vadd.f32 0.0, %v347
      %v349 = vpop.f32.mrb[0].mxu0
      %v350 = vpop.f32.mrb[0].mxu0
      %v351 = vadd.f32 0.0, %v350
      %v352 = vpop.f32.mrb[0].mxu0
      %353 = vdwg.mxu0
      %v354 = vmax.f32 %v340, 1e-24
      %v355 = vmax.f32 %v343, 1e-24
      %v356 = vmax.f32 %v348, 1e-24
      %v357 = vmax.f32 %v351, 1e-24
      %v358 = vrsqrt.pop %v354
      %v359 = vrsqrt.pop %v355
      %v360 = vrsqrt.pop %v356
      %v361 = vrsqrt.pop %v357
      %v362 = vmul.f32 %v231, %v358
      %v363 = vmul.f32 %v232, %v359
      %v364 = vmul.f32 %v233, %v360
      %v365 = vmul.f32 %v234, %v361
      %v366 = vld [vmem:[%s221] sm:$0xf]
      %v367 = vld [vmem:[%s221 + $0x4] sm:$0xf]
      %v368 = vpack.c.bf16 %v363, %v362
      %v369 = vpack.c.bf16 %v365, %v364
      %v372 = vunpack.c.l.b16 %v366
      %v373 = vunpack.c.l.b16 %v367
      %v374 = vpack.c.b16 %v373, %v372
      %vm375 = vcmask 261120
      %v377 = vsel %vm375, %v374, 0
      %379 = vmatprep.subr.bf16.mxu0 0
      %380 = vmatpush1.bf16.msra.mxu0 %v368
      %381 = vmatprep.subr.bf16.mxu0 0
      %382 = vmatpush1.bf16.msra.mxu0 %v369
      %383 = vmatprep.subr.bf16.mxu0 0
      %384 = vmatpush1.bf16.msra.mxu0 0
      %385 = vmatprep.subr.bf16.mxu0 0
      %386 = vmatpush1.bf16.msra.mxu0 0
      %387 = vmatprep.subr.bf16.mxu0 0
      %388 = vmatpush1.bf16.msra.mxu0 0
      %389 = vmatprep.subr.bf16.mxu0 0
      %390 = vmatpush1.bf16.msra.mxu0 0
      %391 = vmatprep.subr.bf16.mxu0 0
      %392 = vmatpush1.bf16.msra.mxu0 0
      %393 = vmatprep.subr.bf16.mxu0 0
      %394 = vmatpush1.bf16.msra.mxu0 0
      %395 = vmatprep.subr.bf16.mxu0 0
      %396 = vmatpush1.bf16.msra.mxu0 0
      %397 = vmatprep.subr.bf16.mxu0 0
      %398 = vmatpush1.bf16.msra.mxu0 0
      %399 = vmatprep.subr.bf16.mxu0 0
      %400 = vmatpush1.bf16.msra.mxu0 0
      %401 = vmatprep.subr.bf16.mxu0 0
      %402 = vmatpush1.bf16.msra.mxu0 0
      %403 = vmatprep.subr.bf16.mxu0 0
      %404 = vmatpush1.bf16.msra.mxu0 0
      %405 = vmatprep.subr.bf16.mxu0 0
      %406 = vmatpush1.bf16.msra.mxu0 0
      %407 = vmatprep.subr.bf16.mxu0 0
      %408 = vmatpush1.bf16.msra.mxu0 0
      %409 = vmatprep.subr.bf16.mxu0 0
      %410 = vmatpush1.bf16.msra.mxu0 0
      %411 = vmatprep.mubr.bf16.mxu0 0
      %412 = vmatmul.mubr.bf16.gmra.mrb[0].mxu0 %v377
      %v413 = vpop.f32.mrb[0].mxu0
      %v414 = vadd.f32 0.0, %v413
      %v415 = vpop.f32.mrb[0].mxu0
      %v416 = vpop.f32.mrb[0].mxu0
      %v417 = vadd.f32 0.0, %v416
      %v418 = vpop.f32.mrb[0].mxu0
      %419 = vdwg.mxu0
      %v420 = vpack.c.bf16 %v417, %v414
      %v421 = vld [vmem:[%s3] sm:$0xff]
      %v422 = vld [vmem:[%s3 + $0x8] sm:$0xff]
      %v423 = vld [vmem:[%s3 + $0x10] sm:$0xff]
      %v424 = vld [vmem:[%s3 + $0x18] sm:$0xff]
      %v425 = vld [vmem:[%s3 + $0x20] sm:$0xff]
      %v426 = vld [vmem:[%s3 + $0x28] sm:$0xff]
      %v427 = vld [vmem:[%s3 + $0x30] sm:$0xff]
      %v428 = vld [vmem:[%s3 + $0x38] sm:$0xff]
      %v429 = vld [vmem:[%s3 + $0x40] sm:$0xff]
      %v430 = vld [vmem:[%s3 + $0x48] sm:$0xff]
      %v431 = vld [vmem:[%s3 + $0x50] sm:$0xff]
      %v432 = vld [vmem:[%s3 + $0x58] sm:$0xff]
      %v433 = vld [vmem:[%s3 + $0x60] sm:$0xff]
      %v434 = vld [vmem:[%s3 + $0x68] sm:$0xff]
      %v435 = vld [vmem:[%s3 + $0x70] sm:$0xff]
      %v436 = vld [vmem:[%s3 + $0x78] sm:$0xff]
      %v437 = vld [vmem:[%s4] sm:$0x3]
      %v439 = vlaneseq
      %v440 = vshrl.u32 %v439, 7
      %v441 = vsub.s32 0, %v440
      %v442 = vrot.slane %v437, %v441
      %v443 = vlaneseq
      %v444 = vshrl.u32 %v443, 7
      %v445 = vsub.s32 1, %v444
      %v446 = vrot.slane %v437, %v445
      %v465 = vunpack.c.l.b16 %v421
      %v466 = vunpack.c.h.b16 %v421
      %v467 = vunpack.c.l.b16 %v422
      %v468 = vunpack.c.h.b16 %v422
      %v469 = vunpack.c.l.b16 %v423
      %v470 = vunpack.c.h.b16 %v423
      %v471 = vunpack.c.l.b16 %v424
      %v472 = vunpack.c.h.b16 %v424
      %v473 = vunpack.c.l.b16 %v425
      %v474 = vunpack.c.h.b16 %v425
      %v475 = vunpack.c.l.b16 %v426
      %v476 = vunpack.c.h.b16 %v426
      %v477 = vunpack.c.l.b16 %v427
      %v478 = vunpack.c.h.b16 %v427
      %v479 = vunpack.c.l.b16 %v428
      %v480 = vunpack.c.h.b16 %v428
      %v481 = vunpack.c.l.b16 %v429
      %v482 = vunpack.c.h.b16 %v429
      %v483 = vunpack.c.l.b16 %v430
      %v484 = vunpack.c.h.b16 %v430
      %v485 = vunpack.c.l.b16 %v431
      %v486 = vunpack.c.h.b16 %v431
      %v487 = vunpack.c.l.b16 %v432
      %v488 = vunpack.c.h.b16 %v432
      %v489 = vunpack.c.l.b16 %v433
      %v490 = vunpack.c.h.b16 %v433
      %v491 = vunpack.c.l.b16 %v434
      %v492 = vunpack.c.h.b16 %v434
      %v493 = vunpack.c.l.b16 %v435
      %v494 = vunpack.c.h.b16 %v435
      %v495 = vunpack.c.l.b16 %v436
      %v496 = vunpack.c.h.b16 %v436
      %v497 = vpack.c.b16 %v467, %v465
      %v498 = vpack.c.b16 %v468, %v466
      %v499 = vpack.c.b16 %v471, %v469
      %v500 = vpack.c.b16 %v472, %v470
      %v501 = vpack.c.b16 %v475, %v473
      %v502 = vpack.c.b16 %v476, %v474
      %v503 = vpack.c.b16 %v479, %v477
      %v504 = vpack.c.b16 %v480, %v478
      %v505 = vpack.c.b16 %v483, %v481
      %v506 = vpack.c.b16 %v484, %v482
      %v507 = vpack.c.b16 %v487, %v485
      %v508 = vpack.c.b16 %v488, %v486
      %v509 = vpack.c.b16 %v491, %v489
      %v510 = vpack.c.b16 %v492, %v490
      %v511 = vpack.c.b16 %v495, %v493
      %v512 = vpack.c.b16 %v496, %v494
      %529 = vmatprep.subr.bf16.mxu0 %v498
      %530 = vmatpush1.bf16.msra.mxu0 %v497
      %531 = vmatprep.subr.bf16.mxu0 %v500
      %532 = vmatpush1.bf16.msra.mxu0 %v499
      %533 = vmatprep.subr.bf16.mxu0 %v502
      %534 = vmatpush1.bf16.msra.mxu0 %v501
      %535 = vmatprep.subr.bf16.mxu0 %v504
      %536 = vmatpush1.bf16.msra.mxu0 %v503
      %537 = vmatprep.subr.bf16.mxu0 %v506
      %538 = vmatpush1.bf16.msra.mxu0 %v505
      %539 = vmatprep.subr.bf16.mxu0 %v508
      %540 = vmatpush1.bf16.msra.mxu0 %v507
      %541 = vmatprep.subr.bf16.mxu0 %v510
      %542 = vmatpush1.bf16.msra.mxu0 %v509
      %543 = vmatprep.subr.bf16.mxu0 %v512
      %544 = vmatpush1.bf16.msra.mxu0 %v511
      %545 = vmatprep.subr.bf16.mxu0 0
      %546 = vmatpush1.bf16.msra.mxu0 0
      %547 = vmatprep.subr.bf16.mxu0 0
      %548 = vmatpush1.bf16.msra.mxu0 0
      %549 = vmatprep.subr.bf16.mxu0 0
      %550 = vmatpush1.bf16.msra.mxu0 0
      %551 = vmatprep.subr.bf16.mxu0 0
      %552 = vmatpush1.bf16.msra.mxu0 0
      %553 = vmatprep.subr.bf16.mxu0 0
      %554 = vmatpush1.bf16.msra.mxu0 0
      %555 = vmatprep.subr.bf16.mxu0 0
      %556 = vmatpush1.bf16.msra.mxu0 0
      %557 = vmatprep.subr.bf16.mxu0 0
      %558 = vmatpush1.bf16.msra.mxu0 0
      %559 = vmatprep.subr.bf16.mxu0 0
      %560 = vmatpush1.bf16.msra.mxu0 0
      %561 = vmatprep.mubr.bf16.mxu0 0
      %562 = vmatmul.mubr.bf16.gmra.mrb[0].mxu0 %v420
      %v563 = vpop.f32.mrb[0].mxu0
      %v564 = vadd.f32 %v442, %v563
      %v565 = vpop.f32.mrb[0].mxu0
      %v566 = vadd.f32 %v446, %v565
      %v567 = vpop.f32.mrb[0].mxu0
      %v568 = vadd.f32 %v442, %v567
      %v569 = vpop.f32.mrb[0].mxu0
      %v570 = vadd.f32 %v446, %v569
      %571 = vdwg.mxu0
      %572 = vst [vmem:[%s228] sm:$0xff] %v564
      %573 = vst [vmem:[%s228 + $0x8] sm:$0xff] %v566
      %574 = vst [vmem:[%s228 + $0x10] sm:$0xff] %v568
      %575 = vst [vmem:[%s228 + $0x18] sm:$0xff] %v570
      %s576 = smul.u32 2, %s16
      %p577 = scmp.lt.s32.totalorder %s576, 3
      %s578 = scalar_select %p577, %s576, 3
      %s579 = smul.addr %s578, 2
      %s580 = smul.addr %s579, 8
      %s581 = scalar_lea.vmem %s5, %s580
      // Predicated region
      $region41: #{simple_gcn_forward.3} parent=39 // pred_check
        %p582 = pneg %p144
      $region42: #{simple_gcn_forward.3} parent=39 // pred_check_branch
        %584 = sbr.rel (%p582) target = $region44
      $region43: #{simple_gcn_forward.3} parent=39 // pred_region
        %s585 = smul.u32 2, %s16
      $region44: #{simple_gcn_forward.3} parent=39 // pred_fallthru
        _
    $region40: #{simple_gcn_forward.3} parent=5 // pred_fallthru
      _
    %p586 = scmp.le.s32.totalorder 2, %s11
    // Predicated region
    $region45: #{simple_gcn_forward.3} parent=5 // pred_check
      %p587 = pneg %p586
    $region46: #{simple_gcn_forward.3} parent=5 // pred_check_branch
      %589 = sbr.rel (%p587) target = $region48
    $region47: #{simple_gcn_forward.3} parent=5 // pred_region
      %s590 = ssub.s32 %s11, 2
      // Predicated region
      $region49: #{simple_gcn_forward.3} parent=47 // pred_check
        %p591 = pneg %p150
      $region50: #{simple_gcn_forward.3} parent=47 // pred_check_branch
        %593 = sbr.rel (%p591) target = $region52
      $region51: #{simple_gcn_forward.3} parent=47 // pred_region
        %s594 = smul.u32 2, %s17
        %p595 = scmp.lt.s32.totalorder %s594, 3
        %s596 = scalar_select %p595, %s594, 3
        %s597 = smul.addr %s596, 2
        %s598 = smul.addr %s597, 8
        %s599 = scalar_lea.vmem %s5, %s598
      $region52: #{simple_gcn_forward.3} parent=47 // pred_fallthru
        _
    $region48: #{simple_gcn_forward.3} parent=5 // pred_fallthru
      _
  $region6: #{simple_gcn_forward.3} parent=0 // loop_footer
    %s15 = sadd.s32 1, %s11
  $region7: #{simple_gcn_forward.3} parent=0 // loop_footer_branch
    %10 = sbr.rel target = $region3
  $region8: #{simple_gcn_forward.3} parent=0 // loop_exit
    _

</llo_original>
